<compile_context>
chip_gen: v6e
topology: v6e:2x2x1
jax: 0.10.0
libtpu: 0.0.40
codegen_flags: <defaults>
</compile_context>

<pallas_src>
import functools

import jax
import jax.numpy as jnp
from jax.experimental import pallas as pl
from jax.experimental.pallas import tpu as pltpu


def _down_kernel(x_ref, mask_ref, w1_ref, b1_ref, w2_ref, b2_ref, o_ref, slab2_ref,
                 *, wp, hp, nb):
    """Fused DoubleConv (BN folded) on a batch tile of `nb` lane-concatenated images.

    Gapped layout: position j = n*(hp+1)*wp + h*wp + w, where row h == hp is a zero
    spacer row after each image.  The padded slab stores the gapped image at offset
    wp+1, with zeros in the first wp+1 and last wp+1 columns, so tap (ky, kx) of
    output position j reads slab[j + ky*wp + kx] (a contiguous slice).

    x_ref    : (C_in, slab_len)  bf16, pre-padded gapped input slab (built in wrapper)
    mask_ref : (3, Lg)           f32: [w != 0, w != wp-1, not-a-spacer-row]
    w1_ref   : (9, C_mid, C_in)  bf16 conv1 taps (BN1 folded), tap k = 3*ky + kx
    b1_ref   : (C_mid, 1)        f32 BN1 shift
    w2_ref   : (9, C_out, C_mid) bf16
    b2_ref   : (C_out, 1)        f32
    o_ref    : (C_out, nb*hp*wp) lane-dense output block
    slab2_ref: (C_mid, slab_len) bf16 scratch, conv2's padded slab
    """
    hg = hp + 1
    m = hp * wp
    lg = nb * hg * wp
    slab_len = lg + 2 * wp + 2
    c_mid = w1_ref.shape[1]
    c_out = w2_ref.shape[1]

    mask_l = mask_ref[0:1, :]   # 0 where w == 0      (kills the left-of-row wrap, kx == 0)
    mask_r = mask_ref[1:2, :]   # 0 where w == wp - 1 (kills the right-of-row wrap, kx == 2)
    gap = mask_ref[2:3, :]      # 0 on the spacer row after each image

    def conv3x3(slab_ref, w_ref, n_out):
        # Group the 9 taps by kx and apply the (position-only) edge masks once per
        # group on the accumulator instead of per tap on the input slices.
        accs = []
        for kx in range(3):
            acc = jnp.zeros((n_out, lg), jnp.float32)
            for ky in range(3):
                start = ky * wp + kx
                acc = acc + jnp.dot(w_ref[3 * ky + kx],
                                    slab_ref[:, start:start + lg],
                                    preferred_element_type=jnp.float32)
            accs.append(acc)
        return accs[1] + mask_l * accs[0] + mask_r * accs[2]

    # ---- conv1 + folded BN1 + ReLU (reads the pre-padded input slab directly) ----
    h1 = jnp.maximum(conv3x3(x_ref, w1_ref, c_mid) + b1_ref[...], 0.0) * gap

    # ---- conv2 slab: zero only the edge strips, write h1 straight into the middle.
    slab2_ref[:, 0:wp + 1] = jnp.zeros((c_mid, wp + 1), slab2_ref.dtype)
    slab2_ref[:, wp + 1 + lg:slab_len] = jnp.zeros((c_mid, wp + 1), slab2_ref.dtype)
    slab2_ref[:, wp + 1:wp + 1 + lg] = h1.astype(slab2_ref.dtype)

    # ---- conv2 + folded BN2 + ReLU ----
    h2 = jnp.maximum(conv3x3(slab2_ref, w2_ref, c_out) + b2_ref[...], 0.0)

    # Drop the spacer rows so the store is a single unmasked lane-dense write.
    parts = [h2[:, n * hg * wp: n * hg * wp + m] for n in range(nb)]
    dense = parts[0] if nb == 1 else jnp.concatenate(parts, axis=1)
    o_ref[...] = dense.astype(o_ref.dtype)


def down_pallas(x, conv1_w, bn1, conv2_w, bn2, *, pooling_size=2, eps=1e-5):
    """Down forward pass: MaxPool2d(pooling_size) -> DoubleConv (BN in eval mode).

    x       : (N, C_in, H, W)
    conv1_w : (C_mid, C_in, 3, 3)   (bias=False)
    bn1     : (gamma, beta, running_mean, running_var), each (C_mid,)
    conv2_w : (C_out, C_mid, 3, 3)  (bias=False)
    bn2     : (gamma, beta, running_mean, running_var), each (C_out,)
    returns : (N, C_out, H // pooling_size, W // pooling_size)
    """
    g1, be1, rm1, rv1 = bn1
    g2, be2, rm2, rv2 = bn2
    N, C_in, H, W = x.shape
    C_mid = conv1_w.shape[0]
    C_out = conv2_w.shape[0]
    P = pooling_size
    Hp, Wp = H // P, W // P
    M = Hp * Wp

    # --- MaxPool2d(P) (floor mode), in the wrapper; see TODO above. -----------
    xp = x[:, :, :Hp * P, :Wp * P].reshape(N, C_in, Hp, P, Wp, P).max(axis=(3, 5))

    # --- Choose how many images share a grid step so the lane dim is >= 128 ---
    NB = N
    for cand in range(1, N + 1):
        if N % cand == 0 and cand * M >= 128:
            NB = cand
            break
    T = N // NB                      # grid size (batch tiles)
    Hg = Hp + 1                      # each image gets one trailing zero spacer row
    Lg = NB * Hg * Wp
    slab_len = Lg + 2 * Wp + 2

    # --- Build conv1's padded, gapped slab with layout-only ops (no compute) ---
    #   [1 slack][Wp top-pad][img0 | spacer][img1 | spacer]...[Wp+1 trailing zeros]
    xt = xp.reshape(T, NB, C_in, Hp, Wp).transpose(0, 2, 1, 3, 4)   # (T,C,NB,Hp,Wp)
    xt = jnp.pad(xt, ((0, 0), (0, 0), (0, 0), (0, 1), (0, 0)))      # add spacer rows
    xg = xt.reshape(T, C_in, Lg)
    x_slab = jnp.pad(xg, ((0, 0), (0, 0), (Wp + 1, Wp + 1))).astype(jnp.bfloat16)

    # --- Fold inference-mode BatchNorm into the bias-free convs; bf16 weights ---
    s1 = g1 / jnp.sqrt(rv1 + eps)
    s2 = g2 / jnp.sqrt(rv2 + eps)
    w1f = conv1_w * s1[:, None, None, None]
    w2f = conv2_w * s2[:, None, None, None]
    b1 = (be1 - rm1 * s1).reshape(C_mid, 1).astype(jnp.float32)
    b2 = (be2 - rm2 * s2).reshape(C_out, 1).astype(jnp.float32)
    # taps[k][o, i] = w[o, i, ky, kx] with k = 3*ky + kx
    w1t = jnp.transpose(w1f, (2, 3, 0, 1)).reshape(9, C_mid, C_in).astype(jnp.bfloat16)
    w2t = jnp.transpose(w2f, (2, 3, 0, 1)).reshape(9, C_out, C_mid).astype(jnp.bfloat16)

    # Position masks (one small resident block; could also be built in-kernel
    # from broadcasted_iota, kept as an input for lowering simplicity).
    j = jnp.arange(Lg, dtype=jnp.int32)
    col = j % Wp
    row = j // Wp
    masks = jnp.stack([(col != 0),
                       (col != Wp - 1),
                       (row % Hg) != (Hg - 1)]).astype(jnp.float32)   # (3, Lg)

    kernel = functools.partial(_down_kernel, wp=Wp, hp=Hp, nb=NB)

    out_flat = pl.pallas_call(
        kernel,
        out_shape=jax.ShapeDtypeStruct((T, C_out, NB * M), x.dtype),
        grid=(T,),
        in_specs=[
            pl.BlockSpec((None, C_in, slab_len), lambda t: (t, 0, 0)),   # per-tile slab
            pl.BlockSpec((3, Lg), lambda t: (0, 0)),                     # resident masks
            pl.BlockSpec((9, C_mid, C_in), lambda t: (0, 0, 0)),         # resident weights
            pl.BlockSpec((C_mid, 1), lambda t: (0, 0)),
            pl.BlockSpec((9, C_out, C_mid), lambda t: (0, 0, 0)),
            pl.BlockSpec((C_out, 1), lambda t: (0, 0)),
        ],
        out_specs=pl.BlockSpec((None, C_out, NB * M), lambda t: (t, 0, 0)),
        scratch_shapes=[
            pltpu.VMEM((C_mid, slab_len), jnp.bfloat16),                 # conv2 slab
        ],
        compiler_params=pltpu.CompilerParams(
            dimension_semantics=("parallel",),
        ),
    )(x_slab, masks, w1t, b1, w2t, b2)

    out = out_flat.reshape(T, C_out, NB, Hp, Wp).transpose(0, 2, 1, 3, 4)
    return out.reshape(N, C_out, Hp, Wp)


def _reference(x, conv1_w, bn1, conv2_w, bn2, *, pooling_size=2, eps=1e-5):
    """Pure-JAX reference for Down (BN in inference mode)."""
    g1, be1, rm1, rv1 = bn1
    g2, be2, rm2, rv2 = bn2
    P = pooling_size
    xp = jax.lax.reduce_window(x, -jnp.inf, jax.lax.max,
                               (1, 1, P, P), (1, 1, P, P), "VALID")

    def conv_bn_relu(h, w, g, b, rm, rv):
        y = jax.lax.conv_general_dilated(
            h, w, window_strides=(1, 1), padding="SAME",
            dimension_numbers=("NCHW", "OIHW", "NCHW"),
            precision=jax.lax.Precision.HIGHEST)
        y = (y - rm[None, :, None, None]) / jnp.sqrt(rv[None, :, None, None] + eps)
        y = y * g[None, :, None, None] + b[None, :, None, None]
        return jnp.maximum(y, 0.0)

    h = conv_bn_relu(xp, conv1_w, g1, be1, rm1, rv1)
    return conv_bn_relu(h, conv2_w, g2, be2, rm2, rv2)


if __name__ == "__main__":
    key = jax.random.PRNGKey(0)
    keys = jax.random.split(key, 12)

    N, C_in, C_out, H, W = 2, 4, 8, 16, 16
    C_mid = C_out

    x = jax.random.normal(keys[0], (N, C_in, H, W), dtype=jnp.float32)

    # Conv weights (PyTorch-style uniform bound 1/sqrt(fan_in)), bias=False.
    bw1 = 1.0 / jnp.sqrt(jnp.float32(C_in * 9))
    conv1_w = jax.random.uniform(keys[1], (C_mid, C_in, 3, 3), jnp.float32, -bw1, bw1)
    bw2 = 1.0 / jnp.sqrt(jnp.float32(C_mid * 9))
    conv2_w = jax.random.uniform(keys[2], (C_out, C_mid, 3, 3), jnp.float32, -bw2, bw2)

    # Non-trivial BatchNorm parameters so the folding is actually exercised.
    bn1 = (jax.random.uniform(keys[3], (C_mid,), jnp.float32, 0.5, 1.5),   # gamma
           jax.random.normal(keys[4], (C_mid,), jnp.float32) * 0.1,        # beta
           jax.random.normal(keys[5], (C_mid,), jnp.float32) * 0.1,        # running mean
           jax.random.uniform(keys[6], (C_mid,), jnp.float32, 0.5, 1.5))   # running var
    bn2 = (jax.random.uniform(keys[7], (C_out,), jnp.float32, 0.5, 1.5),
           jax.random.normal(keys[8], (C_out,), jnp.float32) * 0.1,
           jax.random.normal(keys[9], (C_out,), jnp.float32) * 0.1,
           jax.random.uniform(keys[10], (C_out,), jnp.float32, 0.5, 1.5))

    out = down_pallas(x, conv1_w, bn1, conv2_w, bn2)
    out = jax.block_until_ready(out)

    ref = _reference(x, conv1_w, bn1, conv2_w, bn2)
    assert out.shape == (N, C_out, H // 2, W // 2)
    # Tolerance sized for bf16 MXU operands with f32 accumulation (<=72-term
    # contractions on O(1) data); reference uses HIGHEST-precision f32 conv.
    assert bool(jnp.allclose(out, ref, atol=2e-2, rtol=2e-2)), \
        float(jnp.max(jnp.abs(out - ref)))

    print("KERNEL_OK")
</pallas_src>

<mosaic_0001>
module attributes {stable_mosaic.version = 11 : i64} {
  func.func @_down_kernel(%arg0: i32, %arg1: memref<1x4x162xbf16, #tpu.memory_space<vmem>>, %arg2: memref<3x144xf32, #tpu.memory_space<vmem>>, %arg3: memref<9x8x4xbf16, #tpu.memory_space<vmem>>, %arg4: memref<8x1xf32, #tpu.memory_space<vmem>>, %arg5: memref<9x8x8xbf16, #tpu.memory_space<vmem>>, %arg6: memref<8x1xf32, #tpu.memory_space<vmem>>, %arg7: memref<1x8x128xf32, #tpu.memory_space<vmem>>, %arg8: memref<8x162xbf16, #tpu.memory_space<vmem>>) attributes {dimension_semantics = [#tpu.dimension_semantics<parallel>], iteration_bounds = array<i64: 1>, scalar_prefetch = 0 : i64, scratch_operands = 1 : i64, tpu.core_type = #tpu.core_type<tc>, window_params = [{transform_indices = @transform_0, window_bounds = array<i64: 1, 4, 162>}, {pipeline_mode = #tpu.pipeline_mode<synchronous>, transform_indices = @transform_1, window_bounds = array<i64: 3, 144>}, {pipeline_mode = #tpu.pipeline_mode<synchronous>, transform_indices = @transform_2, window_bounds = array<i64: 9, 8, 4>}, {pipeline_mode = #tpu.pipeline_mode<synchronous>, transform_indices = @transform_3, window_bounds = array<i64: 8, 1>}, {pipeline_mode = #tpu.pipeline_mode<synchronous>, transform_indices = @transform_4, window_bounds = array<i64: 9, 8, 8>}, {pipeline_mode = #tpu.pipeline_mode<synchronous>, transform_indices = @transform_5, window_bounds = array<i64: 8, 1>}, {transform_indices = @transform_6, window_bounds = array<i64: 1, 8, 128>}]} {
    %c0 = arith.constant 0 : index
    %c0_0 = arith.constant 0 : index
    %0 = vector.load %arg2[%c0, %c0_0] : memref<3x144xf32, #tpu.memory_space<vmem>>, vector<1x144xf32>
    %c1 = arith.constant 1 : index
    %c0_1 = arith.constant 0 : index
    %1 = vector.load %arg2[%c1, %c0_1] : memref<3x144xf32, #tpu.memory_space<vmem>>, vector<1x144xf32>
    %c2 = arith.constant 2 : index
    %c0_2 = arith.constant 0 : index
    %2 = vector.load %arg2[%c2, %c0_2] : memref<3x144xf32, #tpu.memory_space<vmem>>, vector<1x144xf32>
    %cst = arith.constant 0.000000e+00 : f32
    %3 = vector.broadcast %cst : f32 to vector<8x144xf32>
    %c0_3 = arith.constant 0 : index
    %c0_4 = arith.constant 0 : index
    %c0_5 = arith.constant 0 : index
    %4 = vector.load %arg3[%c0_3, %c0_4, %c0_5] : memref<9x8x4xbf16, #tpu.memory_space<vmem>>, vector<1x8x4xbf16>
    %5 = vector.shape_cast %4 : vector<1x8x4xbf16> to vector<8x4xbf16>
    %c0_6 = arith.constant 0 : index
    %c0_7 = arith.constant 0 : index
    %c0_8 = arith.constant 0 : index
    %6 = vector.load %arg1[%c0_6, %c0_7, %c0_8] : memref<1x4x162xbf16, #tpu.memory_space<vmem>>, vector<1x4x144xbf16>
    %7 = vector.shape_cast %6 : vector<1x4x144xbf16> to vector<4x144xbf16>
    %cst_9 = arith.constant dense<0.000000e+00> : vector<8x144xf32>
    %8 = tpu.matmul %5, %7, %cst_9 {dimension_numbers = #tpu.dot_dimension_numbers<[1], [0], [0], [1], [0, 0, 1, 1], [], []>} : vector<8x4xbf16>, vector<4x144xbf16>, vector<8x144xf32> -> vector<8x144xf32>
    %9 = arith.addf %3, %8 : vector<8x144xf32>
    %c3 = arith.constant 3 : index
    %c0_10 = arith.constant 0 : index
    %c0_11 = arith.constant 0 : index
    %10 = vector.load %arg3[%c3, %c0_10, %c0_11] : memref<9x8x4xbf16, #tpu.memory_space<vmem>>, vector<1x8x4xbf16>
    %11 = vector.shape_cast %10 : vector<1x8x4xbf16> to vector<8x4xbf16>
    %c0_12 = arith.constant 0 : index
    %c0_13 = arith.constant 0 : index
    %c8 = arith.constant 8 : index
    %12 = vector.load %arg1[%c0_12, %c0_13, %c8] : memref<1x4x162xbf16, #tpu.memory_space<vmem>>, vector<1x4x144xbf16>
    %13 = vector.shape_cast %12 : vector<1x4x144xbf16> to vector<4x144xbf16>
    %cst_14 = arith.constant dense<0.000000e+00> : vector<8x144xf32>
    %14 = tpu.matmul %11, %13, %cst_14 {dimension_numbers = #tpu.dot_dimension_numbers<[1], [0], [0], [1], [0, 0, 1, 1], [], []>} : vector<8x4xbf16>, vector<4x144xbf16>, vector<8x144xf32> -> vector<8x144xf32>
    %15 = arith.addf %9, %14 : vector<8x144xf32>
    %c6 = arith.constant 6 : index
    %c0_15 = arith.constant 0 : index
    %c0_16 = arith.constant 0 : index
    %16 = vector.load %arg3[%c6, %c0_15, %c0_16] : memref<9x8x4xbf16, #tpu.memory_space<vmem>>, vector<1x8x4xbf16>
    %17 = vector.shape_cast %16 : vector<1x8x4xbf16> to vector<8x4xbf16>
    %c0_17 = arith.constant 0 : index
    %c0_18 = arith.constant 0 : index
    %c16 = arith.constant 16 : index
    %18 = vector.load %arg1[%c0_17, %c0_18, %c16] : memref<1x4x162xbf16, #tpu.memory_space<vmem>>, vector<1x4x144xbf16>
    %19 = vector.shape_cast %18 : vector<1x4x144xbf16> to vector<4x144xbf16>
    %cst_19 = arith.constant dense<0.000000e+00> : vector<8x144xf32>
    %20 = tpu.matmul %17, %19, %cst_19 {dimension_numbers = #tpu.dot_dimension_numbers<[1], [0], [0], [1], [0, 0, 1, 1], [], []>} : vector<8x4xbf16>, vector<4x144xbf16>, vector<8x144xf32> -> vector<8x144xf32>
    %21 = arith.addf %15, %20 : vector<8x144xf32>
    %cst_20 = arith.constant 0.000000e+00 : f32
    %22 = vector.broadcast %cst_20 : f32 to vector<8x144xf32>
    %c1_21 = arith.constant 1 : index
    %c0_22 = arith.constant 0 : index
    %c0_23 = arith.constant 0 : index
    %23 = vector.load %arg3[%c1_21, %c0_22, %c0_23] : memref<9x8x4xbf16, #tpu.memory_space<vmem>>, vector<1x8x4xbf16>
    %24 = vector.shape_cast %23 : vector<1x8x4xbf16> to vector<8x4xbf16>
    %c0_24 = arith.constant 0 : index
    %c0_25 = arith.constant 0 : index
    %c1_26 = arith.constant 1 : index
    %25 = vector.load %arg1[%c0_24, %c0_25, %c1_26] : memref<1x4x162xbf16, #tpu.memory_space<vmem>>, vector<1x4x144xbf16>
    %26 = vector.shape_cast %25 : vector<1x4x144xbf16> to vector<4x144xbf16>
    %cst_27 = arith.constant dense<0.000000e+00> : vector<8x144xf32>
    %27 = tpu.matmul %24, %26, %cst_27 {dimension_numbers = #tpu.dot_dimension_numbers<[1], [0], [0], [1], [0, 0, 1, 1], [], []>} : vector<8x4xbf16>, vector<4x144xbf16>, vector<8x144xf32> -> vector<8x144xf32>
    %28 = arith.addf %22, %27 : vector<8x144xf32>
    %c4 = arith.constant 4 : index
    %c0_28 = arith.constant 0 : index
    %c0_29 = arith.constant 0 : index
    %29 = vector.load %arg3[%c4, %c0_28, %c0_29] : memref<9x8x4xbf16, #tpu.memory_space<vmem>>, vector<1x8x4xbf16>
    %30 = vector.shape_cast %29 : vector<1x8x4xbf16> to vector<8x4xbf16>
    %c0_30 = arith.constant 0 : index
    %c0_31 = arith.constant 0 : index
    %c9 = arith.constant 9 : index
    %31 = vector.load %arg1[%c0_30, %c0_31, %c9] : memref<1x4x162xbf16, #tpu.memory_space<vmem>>, vector<1x4x144xbf16>
    %32 = vector.shape_cast %31 : vector<1x4x144xbf16> to vector<4x144xbf16>
    %cst_32 = arith.constant dense<0.000000e+00> : vector<8x144xf32>
    %33 = tpu.matmul %30, %32, %cst_32 {dimension_numbers = #tpu.dot_dimension_numbers<[1], [0], [0], [1], [0, 0, 1, 1], [], []>} : vector<8x4xbf16>, vector<4x144xbf16>, vector<8x144xf32> -> vector<8x144xf32>
    %34 = arith.addf %28, %33 : vector<8x144xf32>
    %c7 = arith.constant 7 : index
    %c0_33 = arith.constant 0 : index
    %c0_34 = arith.constant 0 : index
    %35 = vector.load %arg3[%c7, %c0_33, %c0_34] : memref<9x8x4xbf16, #tpu.memory_space<vmem>>, vector<1x8x4xbf16>
    %36 = vector.shape_cast %35 : vector<1x8x4xbf16> to vector<8x4xbf16>
    %c0_35 = arith.constant 0 : index
    %c0_36 = arith.constant 0 : index
    %c17 = arith.constant 17 : index
    %37 = vector.load %arg1[%c0_35, %c0_36, %c17] : memref<1x4x162xbf16, #tpu.memory_space<vmem>>, vector<1x4x144xbf16>
    %38 = vector.shape_cast %37 : vector<1x4x144xbf16> to vector<4x144xbf16>
    %cst_37 = arith.constant dense<0.000000e+00> : vector<8x144xf32>
    %39 = tpu.matmul %36, %38, %cst_37 {dimension_numbers = #tpu.dot_dimension_numbers<[1], [0], [0], [1], [0, 0, 1, 1], [], []>} : vector<8x4xbf16>, vector<4x144xbf16>, vector<8x144xf32> -> vector<8x144xf32>
    %40 = arith.addf %34, %39 : vector<8x144xf32>
    %cst_38 = arith.constant 0.000000e+00 : f32
    %41 = vector.broadcast %cst_38 : f32 to vector<8x144xf32>
    %c2_39 = arith.constant 2 : index
    %c0_40 = arith.constant 0 : index
    %c0_41 = arith.constant 0 : index
    %42 = vector.load %arg3[%c2_39, %c0_40, %c0_41] : memref<9x8x4xbf16, #tpu.memory_space<vmem>>, vector<1x8x4xbf16>
    %43 = vector.shape_cast %42 : vector<1x8x4xbf16> to vector<8x4xbf16>
    %c0_42 = arith.constant 0 : index
    %c0_43 = arith.constant 0 : index
    %c2_44 = arith.constant 2 : index
    %44 = vector.load %arg1[%c0_42, %c0_43, %c2_44] : memref<1x4x162xbf16, #tpu.memory_space<vmem>>, vector<1x4x144xbf16>
    %45 = vector.shape_cast %44 : vector<1x4x144xbf16> to vector<4x144xbf16>
    %cst_45 = arith.constant dense<0.000000e+00> : vector<8x144xf32>
    %46 = tpu.matmul %43, %45, %cst_45 {dimension_numbers = #tpu.dot_dimension_numbers<[1], [0], [0], [1], [0, 0, 1, 1], [], []>} : vector<8x4xbf16>, vector<4x144xbf16>, vector<8x144xf32> -> vector<8x144xf32>
    %47 = arith.addf %41, %46 : vector<8x144xf32>
    %c5 = arith.constant 5 : index
    %c0_46 = arith.constant 0 : index
    %c0_47 = arith.constant 0 : index
    %48 = vector.load %arg3[%c5, %c0_46, %c0_47] : memref<9x8x4xbf16, #tpu.memory_space<vmem>>, vector<1x8x4xbf16>
    %49 = vector.shape_cast %48 : vector<1x8x4xbf16> to vector<8x4xbf16>
    %c0_48 = arith.constant 0 : index
    %c0_49 = arith.constant 0 : index
    %c10 = arith.constant 10 : index
    %50 = vector.load %arg1[%c0_48, %c0_49, %c10] : memref<1x4x162xbf16, #tpu.memory_space<vmem>>, vector<1x4x144xbf16>
    %51 = vector.shape_cast %50 : vector<1x4x144xbf16> to vector<4x144xbf16>
    %cst_50 = arith.constant dense<0.000000e+00> : vector<8x144xf32>
    %52 = tpu.matmul %49, %51, %cst_50 {dimension_numbers = #tpu.dot_dimension_numbers<[1], [0], [0], [1], [0, 0, 1, 1], [], []>} : vector<8x4xbf16>, vector<4x144xbf16>, vector<8x144xf32> -> vector<8x144xf32>
    %53 = arith.addf %47, %52 : vector<8x144xf32>
    %c8_51 = arith.constant 8 : index
    %c0_52 = arith.constant 0 : index
    %c0_53 = arith.constant 0 : index
    %54 = vector.load %arg3[%c8_51, %c0_52, %c0_53] : memref<9x8x4xbf16, #tpu.memory_space<vmem>>, vector<1x8x4xbf16>
    %55 = vector.shape_cast %54 : vector<1x8x4xbf16> to vector<8x4xbf16>
    %c0_54 = arith.constant 0 : index
    %c0_55 = arith.constant 0 : index
    %c18 = arith.constant 18 : index
    %56 = vector.load %arg1[%c0_54, %c0_55, %c18] : memref<1x4x162xbf16, #tpu.memory_space<vmem>>, vector<1x4x144xbf16>
    %57 = vector.shape_cast %56 : vector<1x4x144xbf16> to vector<4x144xbf16>
    %cst_56 = arith.constant dense<0.000000e+00> : vector<8x144xf32>
    %58 = tpu.matmul %55, %57, %cst_56 {dimension_numbers = #tpu.dot_dimension_numbers<[1], [0], [0], [1], [0, 0, 1, 1], [], []>} : vector<8x4xbf16>, vector<4x144xbf16>, vector<8x144xf32> -> vector<8x144xf32>
    %59 = arith.addf %53, %58 : vector<8x144xf32>
    %60 = vector.broadcast %0 : vector<1x144xf32> to vector<8x144xf32>
    %61 = arith.mulf %60, %21 : vector<8x144xf32>
    %62 = arith.addf %40, %61 : vector<8x144xf32>
    %63 = vector.broadcast %1 : vector<1x144xf32> to vector<8x144xf32>
    %64 = arith.mulf %63, %59 : vector<8x144xf32>
    %65 = arith.addf %62, %64 : vector<8x144xf32>
    %c0_57 = arith.constant 0 : index
    %c0_58 = arith.constant 0 : index
    %66 = vector.load %arg4[%c0_57, %c0_58] : memref<8x1xf32, #tpu.memory_space<vmem>>, vector<8x1xf32>
    %67 = vector.broadcast %66 : vector<8x1xf32> to vector<8x144xf32>
    %68 = arith.addf %65, %67 : vector<8x144xf32>
    %cst_59 = arith.constant 0.000000e+00 : f32
    %69 = vector.broadcast %cst_59 : f32 to vector<8x144xf32>
    %70 = arith.maximumf %68, %69 : vector<8x144xf32>
    %71 = vector.broadcast %2 : vector<1x144xf32> to vector<8x144xf32>
    %72 = arith.mulf %70, %71 : vector<8x144xf32>
    %cst_60 = arith.constant 0.000000e+00 : bf16
    %73 = vector.broadcast %cst_60 : bf16 to vector<8x9xbf16>
    %c0_61 = arith.constant 0 : index
    %c0_62 = arith.constant 0 : index
    %74 = vector.load %arg8[%c0_61, %c0_62] : memref<8x162xbf16, #tpu.memory_space<vmem>>, vector<8x9xbf16>
    tpu.vector_store %arg8[%c0_61, %c0_62], %73 {strides = array<i32>} : memref<8x162xbf16, #tpu.memory_space<vmem>>, vector<8x9xbf16>,
    %cst_63 = arith.constant 0.000000e+00 : bf16
    %75 = vector.broadcast %cst_63 : bf16 to vector<8x9xbf16>
    %c0_64 = arith.constant 0 : index
    %c153 = arith.constant 153 : index
    %76 = vector.load %arg8[%c0_64, %c153] : memref<8x162xbf16, #tpu.memory_space<vmem>>, vector<8x9xbf16>
    tpu.vector_store %arg8[%c0_64, %c153], %75 {strides = array<i32>} : memref<8x162xbf16, #tpu.memory_space<vmem>>, vector<8x9xbf16>,
    %77 = arith.truncf %72 : vector<8x144xf32> to vector<8x144xbf16>
    %c0_65 = arith.constant 0 : index
    %c9_66 = arith.constant 9 : index
    %78 = vector.load %arg8[%c0_65, %c9_66] : memref<8x162xbf16, #tpu.memory_space<vmem>>, vector<8x144xbf16>
    tpu.vector_store %arg8[%c0_65, %c9_66], %77 {strides = array<i32>} : memref<8x162xbf16, #tpu.memory_space<vmem>>, vector<8x144xbf16>,
    %cst_67 = arith.constant 0.000000e+00 : f32
    %79 = vector.broadcast %cst_67 : f32 to vector<8x144xf32>
    %c0_68 = arith.constant 0 : index
    %c0_69 = arith.constant 0 : index
    %c0_70 = arith.constant 0 : index
    %80 = vector.load %arg5[%c0_68, %c0_69, %c0_70] : memref<9x8x8xbf16, #tpu.memory_space<vmem>>, vector<1x8x8xbf16>
    %81 = vector.shape_cast %80 : vector<1x8x8xbf16> to vector<8x8xbf16>
    %c0_71 = arith.constant 0 : index
    %c0_72 = arith.constant 0 : index
    %82 = vector.load %arg8[%c0_71, %c0_72] : memref<8x162xbf16, #tpu.memory_space<vmem>>, vector<8x144xbf16>
    %cst_73 = arith.constant dense<0.000000e+00> : vector<8x144xf32>
    %83 = tpu.matmul %81, %82, %cst_73 {dimension_numbers = #tpu.dot_dimension_numbers<[1], [0], [0], [1], [0, 0, 1, 1], [], []>} : vector<8x8xbf16>, vector<8x144xbf16>, vector<8x144xf32> -> vector<8x144xf32>
    %84 = arith.addf %79, %83 : vector<8x144xf32>
    %c3_74 = arith.constant 3 : index
    %c0_75 = arith.constant 0 : index
    %c0_76 = arith.constant 0 : index
    %85 = vector.load %arg5[%c3_74, %c0_75, %c0_76] : memref<9x8x8xbf16, #tpu.memory_space<vmem>>, vector<1x8x8xbf16>
    %86 = vector.shape_cast %85 : vector<1x8x8xbf16> to vector<8x8xbf16>
    %c0_77 = arith.constant 0 : index
    %c8_78 = arith.constant 8 : index
    %87 = vector.load %arg8[%c0_77, %c8_78] : memref<8x162xbf16, #tpu.memory_space<vmem>>, vector<8x144xbf16>
    %cst_79 = arith.constant dense<0.000000e+00> : vector<8x144xf32>
    %88 = tpu.matmul %86, %87, %cst_79 {dimension_numbers = #tpu.dot_dimension_numbers<[1], [0], [0], [1], [0, 0, 1, 1], [], []>} : vector<8x8xbf16>, vector<8x144xbf16>, vector<8x144xf32> -> vector<8x144xf32>
    %89 = arith.addf %84, %88 : vector<8x144xf32>
    %c6_80 = arith.constant 6 : index
    %c0_81 = arith.constant 0 : index
    %c0_82 = arith.constant 0 : index
    %90 = vector.load %arg5[%c6_80, %c0_81, %c0_82] : memref<9x8x8xbf16, #tpu.memory_space<vmem>>, vector<1x8x8xbf16>
    %91 = vector.shape_cast %90 : vector<1x8x8xbf16> to vector<8x8xbf16>
    %c0_83 = arith.constant 0 : index
    %c16_84 = arith.constant 16 : index
    %92 = vector.load %arg8[%c0_83, %c16_84] : memref<8x162xbf16, #tpu.memory_space<vmem>>, vector<8x144xbf16>
    %cst_85 = arith.constant dense<0.000000e+00> : vector<8x144xf32>
    %93 = tpu.matmul %91, %92, %cst_85 {dimension_numbers = #tpu.dot_dimension_numbers<[1], [0], [0], [1], [0, 0, 1, 1], [], []>} : vector<8x8xbf16>, vector<8x144xbf16>, vector<8x144xf32> -> vector<8x144xf32>
    %94 = arith.addf %89, %93 : vector<8x144xf32>
    %cst_86 = arith.constant 0.000000e+00 : f32
    %95 = vector.broadcast %cst_86 : f32 to vector<8x144xf32>
    %c1_87 = arith.constant 1 : index
    %c0_88 = arith.constant 0 : index
    %c0_89 = arith.constant 0 : index
    %96 = vector.load %arg5[%c1_87, %c0_88, %c0_89] : memref<9x8x8xbf16, #tpu.memory_space<vmem>>, vector<1x8x8xbf16>
    %97 = vector.shape_cast %96 : vector<1x8x8xbf16> to vector<8x8xbf16>
    %c0_90 = arith.constant 0 : index
    %c1_91 = arith.constant 1 : index
    %98 = vector.load %arg8[%c0_90, %c1_91] : memref<8x162xbf16, #tpu.memory_space<vmem>>, vector<8x144xbf16>
    %cst_92 = arith.constant dense<0.000000e+00> : vector<8x144xf32>
    %99 = tpu.matmul %97, %98, %cst_92 {dimension_numbers = #tpu.dot_dimension_numbers<[1], [0], [0], [1], [0, 0, 1, 1], [], []>} : vector<8x8xbf16>, vector<8x144xbf16>, vector<8x144xf32> -> vector<8x144xf32>
    %100 = arith.addf %95, %99 : vector<8x144xf32>
    %c4_93 = arith.constant 4 : index
    %c0_94 = arith.constant 0 : index
    %c0_95 = arith.constant 0 : index
    %101 = vector.load %arg5[%c4_93, %c0_94, %c0_95] : memref<9x8x8xbf16, #tpu.memory_space<vmem>>, vector<1x8x8xbf16>
    %102 = vector.shape_cast %101 : vector<1x8x8xbf16> to vector<8x8xbf16>
    %c0_96 = arith.constant 0 : index
    %c9_97 = arith.constant 9 : index
    %103 = vector.load %arg8[%c0_96, %c9_97] : memref<8x162xbf16, #tpu.memory_space<vmem>>, vector<8x144xbf16>
    %cst_98 = arith.constant dense<0.000000e+00> : vector<8x144xf32>
    %104 = tpu.matmul %102, %103, %cst_98 {dimension_numbers = #tpu.dot_dimension_numbers<[1], [0], [0], [1], [0, 0, 1, 1], [], []>} : vector<8x8xbf16>, vector<8x144xbf16>, vector<8x144xf32> -> vector<8x144xf32>
    %105 = arith.addf %100, %104 : vector<8x144xf32>
    %c7_99 = arith.constant 7 : index
    %c0_100 = arith.constant 0 : index
    %c0_101 = arith.constant 0 : index
    %106 = vector.load %arg5[%c7_99, %c0_100, %c0_101] : memref<9x8x8xbf16, #tpu.memory_space<vmem>>, vector<1x8x8xbf16>
    %107 = vector.shape_cast %106 : vector<1x8x8xbf16> to vector<8x8xbf16>
    %c0_102 = arith.constant 0 : index
    %c17_103 = arith.constant 17 : index
    %108 = vector.load %arg8[%c0_102, %c17_103] : memref<8x162xbf16, #tpu.memory_space<vmem>>, vector<8x144xbf16>
    %cst_104 = arith.constant dense<0.000000e+00> : vector<8x144xf32>
    %109 = tpu.matmul %107, %108, %cst_104 {dimension_numbers = #tpu.dot_dimension_numbers<[1], [0], [0], [1], [0, 0, 1, 1], [], []>} : vector<8x8xbf16>, vector<8x144xbf16>, vector<8x144xf32> -> vector<8x144xf32>
    %110 = arith.addf %105, %109 : vector<8x144xf32>
    %cst_105 = arith.constant 0.000000e+00 : f32
    %111 = vector.broadcast %cst_105 : f32 to vector<8x144xf32>
    %c2_106 = arith.constant 2 : index
    %c0_107 = arith.constant 0 : index
    %c0_108 = arith.constant 0 : index
    %112 = vector.load %arg5[%c2_106, %c0_107, %c0_108] : memref<9x8x8xbf16, #tpu.memory_space<vmem>>, vector<1x8x8xbf16>
    %113 = vector.shape_cast %112 : vector<1x8x8xbf16> to vector<8x8xbf16>
    %c0_109 = arith.constant 0 : index
    %c2_110 = arith.constant 2 : index
    %114 = vector.load %arg8[%c0_109, %c2_110] : memref<8x162xbf16, #tpu.memory_space<vmem>>, vector<8x144xbf16>
    %cst_111 = arith.constant dense<0.000000e+00> : vector<8x144xf32>
    %115 = tpu.matmul %113, %114, %cst_111 {dimension_numbers = #tpu.dot_dimension_numbers<[1], [0], [0], [1], [0, 0, 1, 1], [], []>} : vector<8x8xbf16>, vector<8x144xbf16>, vector<8x144xf32> -> vector<8x144xf32>
    %116 = arith.addf %111, %115 : vector<8x144xf32>
    %c5_112 = arith.constant 5 : index
    %c0_113 = arith.constant 0 : index
    %c0_114 = arith.constant 0 : index
    %117 = vector.load %arg5[%c5_112, %c0_113, %c0_114] : memref<9x8x8xbf16, #tpu.memory_space<vmem>>, vector<1x8x8xbf16>
    %118 = vector.shape_cast %117 : vector<1x8x8xbf16> to vector<8x8xbf16>
    %c0_115 = arith.constant 0 : index
    %c10_116 = arith.constant 10 : index
    %119 = vector.load %arg8[%c0_115, %c10_116] : memref<8x162xbf16, #tpu.memory_space<vmem>>, vector<8x144xbf16>
    %cst_117 = arith.constant dense<0.000000e+00> : vector<8x144xf32>
    %120 = tpu.matmul %118, %119, %cst_117 {dimension_numbers = #tpu.dot_dimension_numbers<[1], [0], [0], [1], [0, 0, 1, 1], [], []>} : vector<8x8xbf16>, vector<8x144xbf16>, vector<8x144xf32> -> vector<8x144xf32>
    %121 = arith.addf %116, %120 : vector<8x144xf32>
    %c8_118 = arith.constant 8 : index
    %c0_119 = arith.constant 0 : index
    %c0_120 = arith.constant 0 : index
    %122 = vector.load %arg5[%c8_118, %c0_119, %c0_120] : memref<9x8x8xbf16, #tpu.memory_space<vmem>>, vector<1x8x8xbf16>
    %123 = vector.shape_cast %122 : vector<1x8x8xbf16> to vector<8x8xbf16>
    %c0_121 = arith.constant 0 : index
    %c18_122 = arith.constant 18 : index
    %124 = vector.load %arg8[%c0_121, %c18_122] : memref<8x162xbf16, #tpu.memory_space<vmem>>, vector<8x144xbf16>
    %cst_123 = arith.constant dense<0.000000e+00> : vector<8x144xf32>
    %125 = tpu.matmul %123, %124, %cst_123 {dimension_numbers = #tpu.dot_dimension_numbers<[1], [0], [0], [1], [0, 0, 1, 1], [], []>} : vector<8x8xbf16>, vector<8x144xbf16>, vector<8x144xf32> -> vector<8x144xf32>
    %126 = arith.addf %121, %125 : vector<8x144xf32>
    %127 = vector.broadcast %0 : vector<1x144xf32> to vector<8x144xf32>
    %128 = arith.mulf %127, %94 : vector<8x144xf32>
    %129 = arith.addf %110, %128 : vector<8x144xf32>
    %130 = vector.broadcast %1 : vector<1x144xf32> to vector<8x144xf32>
    %131 = arith.mulf %130, %126 : vector<8x144xf32>
    %132 = arith.addf %129, %131 : vector<8x144xf32>
    %c0_124 = arith.constant 0 : index
    %c0_125 = arith.constant 0 : index
    %133 = vector.load %arg6[%c0_124, %c0_125] : memref<8x1xf32, #tpu.memory_space<vmem>>, vector<8x1xf32>
    %134 = vector.broadcast %133 : vector<8x1xf32> to vector<8x144xf32>
    %135 = arith.addf %132, %134 : vector<8x144xf32>
    %cst_126 = arith.constant 0.000000e+00 : f32
    %136 = vector.broadcast %cst_126 : f32 to vector<8x144xf32>
    %137 = arith.maximumf %135, %136 : vector<8x144xf32>
    %138 = vector.extract_strided_slice %137 {offsets = [0, 0], sizes = [8, 64], strides = [1, 1]} : vector<8x144xf32> to vector<8x64xf32>
    %139 = vector.extract_strided_slice %137 {offsets = [0, 72], sizes = [8, 64], strides = [1, 1]} : vector<8x144xf32> to vector<8x64xf32>
    %140 = tpu.concatenate %138, %139 in 1 : vector<8x64xf32>, vector<8x64xf32> -> vector<8x128xf32>
    %c0_127 = arith.constant 0 : index
    %c0_128 = arith.constant 0 : index
    %c0_129 = arith.constant 0 : index
    %141 = vector.load %arg7[%c0_127, %c0_128, %c0_129] : memref<1x8x128xf32, #tpu.memory_space<vmem>>, vector<1x8x128xf32>
    %142 = vector.shape_cast %141 : vector<1x8x128xf32> to vector<8x128xf32>
    %143 = vector.shape_cast %140 : vector<8x128xf32> to vector<1x8x128xf32>
    tpu.vector_store %arg7[%c0_127, %c0_128, %c0_129], %143 {strides = array<i32>} : memref<1x8x128xf32, #tpu.memory_space<vmem>>, vector<1x8x128xf32>,
    return
  }
  func.func @transform_0(%arg0: i32) -> (i32, i32, i32) {
    %c0_i32 = arith.constant 0 : i32
    %c0_i32_0 = arith.constant 0 : i32
    %c0_i32_1 = arith.constant 0 : i32
    return %arg0, %c0_i32, %c0_i32_0 : i32, i32, i32
  }
  func.func @transform_1(%arg0: i32) -> (i32, i32) {
    %c0_i32 = arith.constant 0 : i32
    %c0_i32_0 = arith.constant 0 : i32
    %c0_i32_1 = arith.constant 0 : i32
    return %c0_i32, %c0_i32_0 : i32, i32
  }
  func.func @transform_2(%arg0: i32) -> (i32, i32, i32) {
    %c0_i32 = arith.constant 0 : i32
    %c0_i32_0 = arith.constant 0 : i32
    %c0_i32_1 = arith.constant 0 : i32
    %c0_i32_2 = arith.constant 0 : i32
    return %c0_i32, %c0_i32_0, %c0_i32_1 : i32, i32, i32
  }
  func.func @transform_3(%arg0: i32) -> (i32, i32) {
    %c0_i32 = arith.constant 0 : i32
    %c0_i32_0 = arith.constant 0 : i32
    %c0_i32_1 = arith.constant 0 : i32
    return %c0_i32, %c0_i32_0 : i32, i32
  }
  func.func @transform_4(%arg0: i32) -> (i32, i32, i32) {
    %c0_i32 = arith.constant 0 : i32
    %c0_i32_0 = arith.constant 0 : i32
    %c0_i32_1 = arith.constant 0 : i32
    %c0_i32_2 = arith.constant 0 : i32
    return %c0_i32, %c0_i32_0, %c0_i32_1 : i32, i32, i32
  }
  func.func @transform_5(%arg0: i32) -> (i32, i32) {
    %c0_i32 = arith.constant 0 : i32
    %c0_i32_0 = arith.constant 0 : i32
    %c0_i32_1 = arith.constant 0 : i32
    return %c0_i32, %c0_i32_0 : i32, i32
  }
  func.func @transform_6(%arg0: i32) -> (i32, i32, i32) {
    %c0_i32 = arith.constant 0 : i32
    %c0_i32_0 = arith.constant 0 : i32
    %c0_i32_1 = arith.constant 0 : i32
    return %arg0, %c0_i32, %c0_i32_0 : i32, i32, i32
  }
}

</mosaic_0001>

<llo_original>
// kernel: tpu_custom_call.1
$region0: #{tpu_custom_call.1}
  #allocation0 [shape = 'u32[]', space=smem, size = 0x4, offset = 0x4, fixed_abs, tag = 'smem constant byte address 0x4 - core index']
  #allocation1 [shape = 'u32[144,128]{1,0:T(1,128)}', space=vmem, size = 0x12000, scoped, tag = 'internal scratch']
  #allocation2 [shape = 'bf16[8,162]{1,0:T(8,128)(2,1)}', space=vmem, size = 0x1000, scoped, tag = 'scratch operand']
  %s0 = inlined_call_operand.vmem [shape: bf16[1,4,162], index: 0, kind: input, shape index: {}]
  %s1 = inlined_call_operand.vmem [shape: f32[3,144], index: 1, kind: input, shape index: {}]
  %s2 = inlined_call_operand.vmem [shape: bf16[9,8,4], index: 2, kind: input, shape index: {}]
  %s3 = inlined_call_operand.vmem [shape: f32[8,1], index: 3, kind: input, shape index: {}]
  %s4 = inlined_call_operand.vmem [shape: bf16[9,8,8], index: 4, kind: input, shape index: {}]
  %s5 = inlined_call_operand.vmem [shape: f32[8,1], index: 5, kind: input, shape index: {}]
  %s6 = inlined_call_operand.hbm [shape: f32[1,8,128], index: 6, kind: output, shape index: {}]
  %s7 = sld [smem:[#allocation0]]
  $region34: #{tpu_custom_call.1} parent=0
    _
  %s9 = ssub.s32 1, %s7
  %s10 = scalar_select 0, %s9, %s7
  $region1: #{tpu_custom_call.1} parent=0
    #allocation3 [shape = 'u8[4096]{0}', space=vmem, size = 0x1000, scoped, tag = 'output window, operand 0, single buffered']
    #allocation4 [shape = 's32[1]{0}', space=sflag, size = 0x4, scoped, tag = 'scoped memory for tpu_custom_call.1']
    %11 = vsyncpa [#allocation4], 0
    // Predicated region
    $region2: #{tpu_custom_call.1} parent=1 // pred_check
      _
    $region3: #{tpu_custom_call.1} parent=1 // pred_check_branch
      %13 = sbr.rel (0) target = $region5
    $region4: #{tpu_custom_call.1} parent=1 // pred_region
      _
    $region5: #{tpu_custom_call.1} parent=1 // pred_fallthru
      _
    // Predicated region
    $region6: #{tpu_custom_call.1} parent=1 // pred_check
      _
    $region7: #{tpu_custom_call.1} parent=1 // pred_check_branch
      %15 = sbr.rel (0) target = $region9
    $region8: #{tpu_custom_call.1} parent=1 // pred_region
      _
    $region9: #{tpu_custom_call.1} parent=1 // pred_fallthru
      _
    // Predicated region
    $region10: #{tpu_custom_call.1} parent=1 // pred_check
      _
    $region11: #{tpu_custom_call.1} parent=1 // pred_check_branch
      %17 = sbr.rel (0) target = $region13
    $region12: #{tpu_custom_call.1} parent=1 // pred_region
      _
    $region13: #{tpu_custom_call.1} parent=1 // pred_fallthru
      _
    // Predicated region
    $region14: #{tpu_custom_call.1} parent=1 // pred_check
      _
    $region15: #{tpu_custom_call.1} parent=1 // pred_check_branch
      %19 = sbr.rel (0) target = $region17
    $region16: #{tpu_custom_call.1} parent=1 // pred_region
      _
    $region17: #{tpu_custom_call.1} parent=1 // pred_fallthru
      _
    // Predicated region
    $region18: #{tpu_custom_call.1} parent=1 // pred_check
      _
    $region19: #{tpu_custom_call.1} parent=1 // pred_check_branch
      %21 = sbr.rel (0) target = $region21
    $region20: #{tpu_custom_call.1} parent=1 // pred_region
      _
    $region21: #{tpu_custom_call.1} parent=1 // pred_fallthru
      _
    // Predicated region
    $region22: #{tpu_custom_call.1} parent=1 // pred_check
      _
    $region23: #{tpu_custom_call.1} parent=1 // pred_check_branch
      %23 = sbr.rel (0) target = $region25
    $region24: #{tpu_custom_call.1} parent=1 // pred_region
      _
    $region25: #{tpu_custom_call.1} parent=1 // pred_fallthru
      _
    %v25 = vld [vmem:[%s1] ss:$4 sm:$0x3]
    %s26 = scalar_lea.vmem %s1, 1
    %v27 = vld [vmem:[%s26] ss:$4 sm:$0x3]
    %s28 = scalar_lea.vmem %s1, 2
    %v29 = vld [vmem:[%s28] ss:$4 sm:$0x3]
    %v30 = vld [vmem:[%s2] sm:$0xf]
    %v31 = vld [vmem:[%s0] sm:$0xf]
    %s32 = scalar_lea.vmem %s2, 12
    %v33 = vld [vmem:[%s32] sm:$0xf]
    %v36 = vunpack.c.l.s4 1983009808
    %v37 = vunpack.c.0.s8 %v36
    %v38 = vlaneseq
    %v39 = vshrl.u32 %v38, 7
    %v40 = vsub.s32 %v37, %v39
    %v41 = vrot.slane %v31, %v40
    %v42 = vcombine.high %v41, %v41
    %43 = vrot.lane.b32.xlu0 %v41, 120
    %v44 = vpop.permute.xlu0 %43
    %45 = vrot.lane.b32.xlu0 %v42, 120
    %v46 = vpop.permute.xlu0 %45
    %vm47 = vcmask 982016
    %v48 = vsel %vm47, %v44, %v46
    %vm49 = vcmask 31744
    %v51 = vsel %vm49, %v33, 0
    %vm53 = vcmask 1041408
    %v55 = vsel %vm53, %v48, 0
    %v58 = vsel %vm53, %v46, 0
    %60 = vmatprep.subr.bf16.mxu0 0
    %61 = vmatpush1.bf16.msra.mxu0 0
    %62 = vmatprep.subr.bf16.mxu0 0
    %63 = vmatpush1.bf16.msra.mxu0 0
    %64 = vmatprep.subr.bf16.mxu0 0
    %65 = vmatpush1.bf16.msra.mxu0 0
    %66 = vmatprep.subr.bf16.mxu0 0
    %67 = vmatpush1.bf16.msra.mxu0 0
    %68 = vmatprep.subr.bf16.mxu0 0
    %69 = vmatpush1.bf16.msra.mxu0 0
    %70 = vmatprep.subr.bf16.mxu0 0
    %71 = vmatpush1.bf16.msra.mxu0 0
    %72 = vmatprep.subr.bf16.mxu0 0
    %73 = vmatpush1.bf16.msra.mxu0 0
    %74 = vmatprep.subr.bf16.mxu0 %v58
    %75 = vmatpush1.bf16.msra.mxu0 %v55
    %76 = vmatprep.subr.bf16.mxu0 0
    %77 = vmatpush2.bf16.msra.mxu0 0
    %78 = vmatprep.subr.bf16.mxu0 0
    %79 = vmatpush2.bf16.msra.mxu0 0
    %80 = vmatprep.subr.bf16.mxu0 0
    %81 = vmatpush2.bf16.msra.mxu0 0
    %82 = vmatprep.subr.bf16.mxu0 0
    %83 = vmatpush2.bf16.msra.mxu0 0
    %84 = vmatprep.subr.bf16.mxu0 0
    %85 = vmatpush2.bf16.msra.mxu0 0
    %86 = vmatprep.subr.bf16.mxu0 0
    %87 = vmatpush2.bf16.msra.mxu0 0
    %88 = vmatprep.subr.bf16.mxu0 0
    %89 = vmatpush2.bf16.msra.mxu0 0
    %90 = vmatprep.subr.bf16.mxu0 0
    %91 = vmatpush2.bf16.msra.mxu0 0
    %92 = vmatprep.mubr.bf16.mxu0 0
    %93 = vmatmul.mubr.bf16.gmra.mxu0 %v51
    %v94 = vpop.f32.mrf.mxu0
    %v95 = vadd.f32 0.0, %v94
    %v96 = vpop.f32.mrf.mxu0
    %v97 = vadd.f32 0.0, %v96
    %v98 = vpop.f32.mrf.mxu0
    %v99 = vpop.f32.mrf.mxu0
    %100 = vdwg.mxu0
    %v102 = vsel %vm49, %v30, 0
    %v105 = vsel %vm53, %v41, 0
    %v108 = vsel %vm53, %v42, 0
    %110 = vmatprep.subr.bf16.mxu0 0
    %111 = vmatpush1.bf16.msra.mxu0 0
    %112 = vmatprep.subr.bf16.mxu0 0
    %113 = vmatpush1.bf16.msra.mxu0 0
    %114 = vmatprep.subr.bf16.mxu0 0
    %115 = vmatpush1.bf16.msra.mxu0 0
    %116 = vmatprep.subr.bf16.mxu0 0
    %117 = vmatpush1.bf16.msra.mxu0 0
    %118 = vmatprep.subr.bf16.mxu0 0
    %119 = vmatpush1.bf16.msra.mxu0 0
    %120 = vmatprep.subr.bf16.mxu0 0
    %121 = vmatpush1.bf16.msra.mxu0 0
    %122 = vmatprep.subr.bf16.mxu0 0
    %123 = vmatpush1.bf16.msra.mxu0 0
    %124 = vmatprep.subr.bf16.mxu0 %v108
    %125 = vmatpush1.bf16.msra.mxu0 %v105
    %126 = vmatprep.subr.bf16.mxu0 0
    %127 = vmatpush2.bf16.msra.mxu0 0
    %128 = vmatprep.subr.bf16.mxu0 0
    %129 = vmatpush2.bf16.msra.mxu0 0
    %130 = vmatprep.subr.bf16.mxu0 0
    %131 = vmatpush2.bf16.msra.mxu0 0
    %132 = vmatprep.subr.bf16.mxu0 0
    %133 = vmatpush2.bf16.msra.mxu0 0
    %134 = vmatprep.subr.bf16.mxu0 0
    %135 = vmatpush2.bf16.msra.mxu0 0
    %136 = vmatprep.subr.bf16.mxu0 0
    %137 = vmatpush2.bf16.msra.mxu0 0
    %138 = vmatprep.subr.bf16.mxu0 0
    %139 = vmatpush2.bf16.msra.mxu0 0
    %140 = vmatprep.subr.bf16.mxu0 0
    %141 = vmatpush2.bf16.msra.mxu0 0
    %142 = vmatprep.mubr.bf16.mxu0 0
    %143 = vmatmul.mubr.bf16.gmra.mxu0 %v102
    %v144 = vpop.f32.mrf.mxu0
    %v145 = vadd.f32 %v95, %v144
    %v146 = vpop.f32.mrf.mxu0
    %v147 = vadd.f32 %v97, %v146
    %v148 = vpop.f32.mrf.mxu0
    %v149 = vpop.f32.mrf.mxu0
    %150 = vdwg.mxu0
    %s151 = scalar_lea.vmem %s2, 24
    %v152 = vld [vmem:[%s151] sm:$0xf]
    %v153 = vld [vmem:[%s0] sm:$0xf]
    %v156 = vunpack.c.l.s4 1983009808
    %v157 = vunpack.c.0.s8 %v156
    %v158 = vlaneseq
    %v159 = vshrl.u32 %v158, 7
    %v160 = vsub.s32 %v157, %v159
    %v161 = vrot.slane %v153, %v160
    %v162 = vcombine.high %v161, %v161
    %163 = vrot.lane.b32.xlu0 %v161, 112
    %v164 = vpop.permute.xlu0 %163
    %165 = vrot.lane.b32.xlu0 %v162, 112
    %v166 = vpop.permute.xlu0 %165
    %vm167 = vcmask 916480
    %v168 = vsel %vm167, %v164, %v166
    %v170 = vsel %vm49, %v152, 0
    %v173 = vsel %vm53, %v168, 0
    %v176 = vsel %vm53, %v166, 0
    %178 = vmatprep.subr.bf16.mxu0 0
    %179 = vmatpush1.bf16.msra.mxu0 0
    %180 = vmatprep.subr.bf16.mxu0 0
    %181 = vmatpush1.bf16.msra.mxu0 0
    %182 = vmatprep.subr.bf16.mxu0 0
    %183 = vmatpush1.bf16.msra.mxu0 0
    %184 = vmatprep.subr.bf16.mxu0 0
    %185 = vmatpush1.bf16.msra.mxu0 0
    %186 = vmatprep.subr.bf16.mxu0 0
    %187 = vmatpush1.bf16.msra.mxu0 0
    %188 = vmatprep.subr.bf16.mxu0 0
    %189 = vmatpush1.bf16.msra.mxu0 0
    %190 = vmatprep.subr.bf16.mxu0 0
    %191 = vmatpush1.bf16.msra.mxu0 0
    %192 = vmatprep.subr.bf16.mxu0 %v176
    %193 = vmatpush1.bf16.msra.mxu0 %v173
    %194 = vmatprep.subr.bf16.mxu0 0
    %195 = vmatpush2.bf16.msra.mxu0 0
    %196 = vmatprep.subr.bf16.mxu0 0
    %197 = vmatpush2.bf16.msra.mxu0 0
    %198 = vmatprep.subr.bf16.mxu0 0
    %199 = vmatpush2.bf16.msra.mxu0 0
    %200 = vmatprep.subr.bf16.mxu0 0
    %201 = vmatpush2.bf16.msra.mxu0 0
    %202 = vmatprep.subr.bf16.mxu0 0
    %203 = vmatpush2.bf16.msra.mxu0 0
    %204 = vmatprep.subr.bf16.mxu0 0
    %205 = vmatpush2.bf16.msra.mxu0 0
    %206 = vmatprep.subr.bf16.mxu0 0
    %207 = vmatpush2.bf16.msra.mxu0 0
    %208 = vmatprep.subr.bf16.mxu0 0
    %209 = vmatpush2.bf16.msra.mxu0 0
    %210 = vmatprep.mubr.bf16.mxu0 0
    %211 = vmatmul.mubr.bf16.gmra.mxu0 %v170
    %v212 = vpop.f32.mrf.mxu0
    %v213 = vadd.f32 0.0, %v212
    %v214 = vpop.f32.mrf.mxu0
    %v215 = vadd.f32 0.0, %v214
    %v216 = vpop.f32.mrf.mxu0
    %v217 = vpop.f32.mrf.mxu0
    %218 = vdwg.mxu0
    %v219 = vadd.f32 %v145, %v213
    %v220 = vadd.f32 %v147, %v215
    %s221 = scalar_lea.vmem %s2, 4
    %v222 = vld [vmem:[%s221] sm:$0xf]
    %v223 = vld [vmem:[%s0] sm:$0xf]
    %s224 = scalar_lea.vmem %s2, 16
    %v225 = vld [vmem:[%s224] sm:$0xf]
    %v228 = vunpack.c.l.s4 1983009808
    %v229 = vunpack.c.0.s8 %v228
    %v230 = vlaneseq
    %v231 = vshrl.u32 %v230, 7
    %v232 = vsub.s32 %v229, %v231
    %v233 = vrot.slane %v223, %v232
    %v234 = vcombine.high %v233, %v233
    %235 = vrot.lane.b32.xlu0 %v233, 119
    %v236 = vpop.permute.xlu0 %235
    %237 = vrot.lane.b32.xlu0 %v234, 119
    %v238 = vpop.permute.xlu0 %237
    %vm239 = vcmask 973824
    %v240 = vsel %vm239, %v236, %v238
    %v242 = vsel %vm49, %v225, 0
    %v245 = vsel %vm53, %v240, 0
    %v248 = vsel %vm53, %v238, 0
    %250 = vmatprep.subr.bf16.mxu0 0
    %251 = vmatpush1.bf16.msra.mxu0 0
    %252 = vmatprep.subr.bf16.mxu0 0
    %253 = vmatpush1.bf16.msra.mxu0 0
    %254 = vmatprep.subr.bf16.mxu0 0
    %255 = vmatpush1.bf16.msra.mxu0 0
    %256 = vmatprep.subr.bf16.mxu0 0
    %257 = vmatpush1.bf16.msra.mxu0 0
    %258 = vmatprep.subr.bf16.mxu0 0
    %259 = vmatpush1.bf16.msra.mxu0 0
    %260 = vmatprep.subr.bf16.mxu0 0
    %261 = vmatpush1.bf16.msra.mxu0 0
    %262 = vmatprep.subr.bf16.mxu0 0
    %263 = vmatpush1.bf16.msra.mxu0 0
    %264 = vmatprep.subr.bf16.mxu0 %v248
    %265 = vmatpush1.bf16.msra.mxu0 %v245
    %266 = vmatprep.subr.bf16.mxu0 0
    %267 = vmatpush2.bf16.msra.mxu0 0
    %268 = vmatprep.subr.bf16.mxu0 0
    %269 = vmatpush2.bf16.msra.mxu0 0
    %270 = vmatprep.subr.bf16.mxu0 0
    %271 = vmatpush2.bf16.msra.mxu0 0
    %272 = vmatprep.subr.bf16.mxu0 0
    %273 = vmatpush2.bf16.msra.mxu0 0
    %274 = vmatprep.subr.bf16.mxu0 0
    %275 = vmatpush2.bf16.msra.mxu0 0
    %276 = vmatprep.subr.bf16.mxu0 0
    %277 = vmatpush2.bf16.msra.mxu0 0
    %278 = vmatprep.subr.bf16.mxu0 0
    %279 = vmatpush2.bf16.msra.mxu0 0
    %280 = vmatprep.subr.bf16.mxu0 0
    %281 = vmatpush2.bf16.msra.mxu0 0
    %282 = vmatprep.mubr.bf16.mxu0 0
    %283 = vmatmul.mubr.bf16.gmra.mxu0 %v242
    %v284 = vpop.f32.mrf.mxu0
    %v285 = vadd.f32 0.0, %v284
    %v286 = vpop.f32.mrf.mxu0
    %v287 = vadd.f32 0.0, %v286
    %v288 = vpop.f32.mrf.mxu0
    %v289 = vpop.f32.mrf.mxu0
    %290 = vdwg.mxu0
    %291 = vrot.lane.b32.xlu0 %v233, 127
    %v292 = vpop.permute.xlu0 %291
    %293 = vrot.lane.b32.xlu0 %v234, 127
    %v294 = vpop.permute.xlu0 %293
    %vm295 = vcmask 1039360
    %v296 = vsel %vm295, %v292, %v294
    %v298 = vsel %vm49, %v222, 0
    %v301 = vsel %vm53, %v296, 0
    %v304 = vsel %vm53, %v294, 0
    %306 = vmatprep.subr.bf16.mxu0 0
    %307 = vmatpush1.bf16.msra.mxu0 0
    %308 = vmatprep.subr.bf16.mxu0 0
    %309 = vmatpush1.bf16.msra.mxu0 0
    %310 = vmatprep.subr.bf16.mxu0 0
    %311 = vmatpush1.bf16.msra.mxu0 0
    %312 = vmatprep.subr.bf16.mxu0 0
    %313 = vmatpush1.bf16.msra.mxu0 0
    %314 = vmatprep.subr.bf16.mxu0 0
    %315 = vmatpush1.bf16.msra.mxu0 0
    %316 = vmatprep.subr.bf16.mxu0 0
    %317 = vmatpush1.bf16.msra.mxu0 0
    %318 = vmatprep.subr.bf16.mxu0 0
    %319 = vmatpush1.bf16.msra.mxu0 0
    %320 = vmatprep.subr.bf16.mxu0 %v304
    %321 = vmatpush1.bf16.msra.mxu0 %v301
    %322 = vmatprep.subr.bf16.mxu0 0
    %323 = vmatpush2.bf16.msra.mxu0 0
    %324 = vmatprep.subr.bf16.mxu0 0
    %325 = vmatpush2.bf16.msra.mxu0 0
    %326 = vmatprep.subr.bf16.mxu0 0
    %327 = vmatpush2.bf16.msra.mxu0 0
    %328 = vmatprep.subr.bf16.mxu0 0
    %329 = vmatpush2.bf16.msra.mxu0 0
    %330 = vmatprep.subr.bf16.mxu0 0
    %331 = vmatpush2.bf16.msra.mxu0 0
    %332 = vmatprep.subr.bf16.mxu0 0
    %333 = vmatpush2.bf16.msra.mxu0 0
    %334 = vmatprep.subr.bf16.mxu0 0
    %335 = vmatpush2.bf16.msra.mxu0 0
    %336 = vmatprep.subr.bf16.mxu0 0
    %337 = vmatpush2.bf16.msra.mxu0 0
    %338 = vmatprep.mubr.bf16.mxu0 0
    %339 = vmatmul.mubr.bf16.gmra.mxu0 %v298
    %v340 = vpop.f32.mrf.mxu0
    %v341 = vadd.f32 %v285, %v340
    %v342 = vpop.f32.mrf.mxu0
    %v343 = vadd.f32 %v287, %v342
    %v344 = vpop.f32.mrf.mxu0
    %v345 = vpop.f32.mrf.mxu0
    %346 = vdwg.mxu0
    %s347 = scalar_lea.vmem %s2, 28
    %v348 = vld [vmem:[%s347] sm:$0xf]
    %v349 = vld [vmem:[%s0] sm:$0xf]
    %v352 = vunpack.c.l.s4 1983009808
    %v353 = vunpack.c.0.s8 %v352
    %v354 = vlaneseq
    %v355 = vshrl.u32 %v354, 7
    %v356 = vsub.s32 %v353, %v355
    %v357 = vrot.slane %v349, %v356
    %v358 = vcombine.high %v357, %v357
    %359 = vrot.lane.b32.xlu0 %v357, 111
    %v360 = vpop.permute.xlu0 %359
    %361 = vrot.lane.b32.xlu0 %v358, 111
    %v362 = vpop.permute.xlu0 %361
    %vm363 = vcmask 908288
    %v364 = vsel %vm363, %v360, %v362
    %v366 = vsel %vm49, %v348, 0
    %v369 = vsel %vm53, %v364, 0
    %v372 = vsel %vm53, %v362, 0
    %374 = vmatprep.subr.bf16.mxu0 0
    %375 = vmatpush1.bf16.msra.mxu0 0
    %376 = vmatprep.subr.bf16.mxu0 0
    %377 = vmatpush1.bf16.msra.mxu0 0
    %378 = vmatprep.subr.bf16.mxu0 0
    %379 = vmatpush1.bf16.msra.mxu0 0
    %380 = vmatprep.subr.bf16.mxu0 0
    %381 = vmatpush1.bf16.msra.mxu0 0
    %382 = vmatprep.subr.bf16.mxu0 0
    %383 = vmatpush1.bf16.msra.mxu0 0
    %384 = vmatprep.subr.bf16.mxu0 0
    %385 = vmatpush1.bf16.msra.mxu0 0
    %386 = vmatprep.subr.bf16.mxu0 0
    %387 = vmatpush1.bf16.msra.mxu0 0
    %388 = vmatprep.subr.bf16.mxu0 %v372
    %389 = vmatpush1.bf16.msra.mxu0 %v369
    %390 = vmatprep.subr.bf16.mxu0 0
    %391 = vmatpush2.bf16.msra.mxu0 0
    %392 = vmatprep.subr.bf16.mxu0 0
    %393 = vmatpush2.bf16.msra.mxu0 0
    %394 = vmatprep.subr.bf16.mxu0 0
    %395 = vmatpush2.bf16.msra.mxu0 0
    %396 = vmatprep.subr.bf16.mxu0 0
    %397 = vmatpush2.bf16.msra.mxu0 0
    %398 = vmatprep.subr.bf16.mxu0 0
    %399 = vmatpush2.bf16.msra.mxu0 0
    %400 = vmatprep.subr.bf16.mxu0 0
    %401 = vmatpush2.bf16.msra.mxu0 0
    %402 = vmatprep.subr.bf16.mxu0 0
    %403 = vmatpush2.bf16.msra.mxu0 0
    %404 = vmatprep.subr.bf16.mxu0 0
    %405 = vmatpush2.bf16.msra.mxu0 0
    %406 = vmatprep.mubr.bf16.mxu0 0
    %407 = vmatmul.mubr.bf16.gmra.mxu0 %v366
    %v408 = vpop.f32.mrf.mxu0
    %v409 = vadd.f32 0.0, %v408
    %v410 = vpop.f32.mrf.mxu0
    %v411 = vadd.f32 0.0, %v410
    %v412 = vpop.f32.mrf.mxu0
    %v413 = vpop.f32.mrf.mxu0
    %414 = vdwg.mxu0
    %v415 = vadd.f32 %v341, %v409
    %v416 = vadd.f32 %v343, %v411
    %s417 = scalar_lea.vmem %s2, 8
    %v418 = vld [vmem:[%s417] sm:$0xf]
    %v419 = vld [vmem:[%s0] sm:$0xf]
    %s420 = scalar_lea.vmem %s2, 20
    %v421 = vld [vmem:[%s420] sm:$0xf]
    %v424 = vunpack.c.l.s4 1983009808
    %v425 = vunpack.c.0.s8 %v424
    %v426 = vlaneseq
    %v427 = vshrl.u32 %v426, 7
    %v428 = vsub.s32 %v425, %v427
    %v429 = vrot.slane %v419, %v428
    %v430 = vcombine.high %v429, %v429
    %431 = vrot.lane.b32.xlu0 %v429, 118
    %v432 = vpop.permute.xlu0 %431
    %433 = vrot.lane.b32.xlu0 %v430, 118
    %v434 = vpop.permute.xlu0 %433
    %vm435 = vcmask 965632
    %v436 = vsel %vm435, %v432, %v434
    %v438 = vsel %vm49, %v421, 0
    %v441 = vsel %vm53, %v436, 0
    %v444 = vsel %vm53, %v434, 0
    %446 = vmatprep.subr.bf16.mxu0 0
    %447 = vmatpush1.bf16.msra.mxu0 0
    %448 = vmatprep.subr.bf16.mxu0 0
    %449 = vmatpush1.bf16.msra.mxu0 0
    %450 = vmatprep.subr.bf16.mxu0 0
    %451 = vmatpush1.bf16.msra.mxu0 0
    %452 = vmatprep.subr.bf16.mxu0 0
    %453 = vmatpush1.bf16.msra.mxu0 0
    %454 = vmatprep.subr.bf16.mxu0 0
    %455 = vmatpush1.bf16.msra.mxu0 0
    %456 = vmatprep.subr.bf16.mxu0 0
    %457 = vmatpush1.bf16.msra.mxu0 0
    %458 = vmatprep.subr.bf16.mxu0 0
    %459 = vmatpush1.bf16.msra.mxu0 0
    %460 = vmatprep.subr.bf16.mxu0 %v444
    %461 = vmatpush1.bf16.msra.mxu0 %v441
    %462 = vmatprep.subr.bf16.mxu0 0
    %463 = vmatpush2.bf16.msra.mxu0 0
    %464 = vmatprep.subr.bf16.mxu0 0
    %465 = vmatpush2.bf16.msra.mxu0 0
    %466 = vmatprep.subr.bf16.mxu0 0
    %467 = vmatpush2.bf16.msra.mxu0 0
    %468 = vmatprep.subr.bf16.mxu0 0
    %469 = vmatpush2.bf16.msra.mxu0 0
    %470 = vmatprep.subr.bf16.mxu0 0
    %471 = vmatpush2.bf16.msra.mxu0 0
    %472 = vmatprep.subr.bf16.mxu0 0
    %473 = vmatpush2.bf16.msra.mxu0 0
    %474 = vmatprep.subr.bf16.mxu0 0
    %475 = vmatpush2.bf16.msra.mxu0 0
    %476 = vmatprep.subr.bf16.mxu0 0
    %477 = vmatpush2.bf16.msra.mxu0 0
    %478 = vmatprep.mubr.bf16.mxu0 0
    %479 = vmatmul.mubr.bf16.gmra.mxu0 %v438
    %v480 = vpop.f32.mrf.mxu0
    %v481 = vadd.f32 0.0, %v480
    %v482 = vpop.f32.mrf.mxu0
    %v483 = vadd.f32 0.0, %v482
    %v484 = vpop.f32.mrf.mxu0
    %v485 = vpop.f32.mrf.mxu0
    %486 = vdwg.mxu0
    %487 = vrot.lane.b32.xlu0 %v429, 126
    %v488 = vpop.permute.xlu0 %487
    %489 = vrot.lane.b32.xlu0 %v430, 126
    %v490 = vpop.permute.xlu0 %489
    %vm491 = vcmask 1031168
    %v492 = vsel %vm491, %v488, %v490
    %v494 = vsel %vm49, %v418, 0
    %v497 = vsel %vm53, %v492, 0
    %v500 = vsel %vm53, %v490, 0
    %502 = vmatprep.subr.bf16.mxu0 0
    %503 = vmatpush1.bf16.msra.mxu0 0
    %504 = vmatprep.subr.bf16.mxu0 0
    %505 = vmatpush1.bf16.msra.mxu0 0
    %506 = vmatprep.subr.bf16.mxu0 0
    %507 = vmatpush1.bf16.msra.mxu0 0
    %508 = vmatprep.subr.bf16.mxu0 0
    %509 = vmatpush1.bf16.msra.mxu0 0
    %510 = vmatprep.subr.bf16.mxu0 0
    %511 = vmatpush1.bf16.msra.mxu0 0
    %512 = vmatprep.subr.bf16.mxu0 0
    %513 = vmatpush1.bf16.msra.mxu0 0
    %514 = vmatprep.subr.bf16.mxu0 0
    %515 = vmatpush1.bf16.msra.mxu0 0
    %516 = vmatprep.subr.bf16.mxu0 %v500
    %517 = vmatpush1.bf16.msra.mxu0 %v497
    %518 = vmatprep.subr.bf16.mxu0 0
    %519 = vmatpush2.bf16.msra.mxu0 0
    %520 = vmatprep.subr.bf16.mxu0 0
    %521 = vmatpush2.bf16.msra.mxu0 0
    %522 = vmatprep.subr.bf16.mxu0 0
    %523 = vmatpush2.bf16.msra.mxu0 0
    %524 = vmatprep.subr.bf16.mxu0 0
    %525 = vmatpush2.bf16.msra.mxu0 0
    %526 = vmatprep.subr.bf16.mxu0 0
    %527 = vmatpush2.bf16.msra.mxu0 0
    %528 = vmatprep.subr.bf16.mxu0 0
    %529 = vmatpush2.bf16.msra.mxu0 0
    %530 = vmatprep.subr.bf16.mxu0 0
    %531 = vmatpush2.bf16.msra.mxu0 0
    %532 = vmatprep.subr.bf16.mxu0 0
    %533 = vmatpush2.bf16.msra.mxu0 0
    %534 = vmatprep.mubr.bf16.mxu0 0
    %535 = vmatmul.mubr.bf16.gmra.mxu0 %v494
    %v536 = vpop.f32.mrf.mxu0
    %v537 = vadd.f32 %v481, %v536
    %v538 = vpop.f32.mrf.mxu0
    %v539 = vadd.f32 %v483, %v538
    %v540 = vpop.f32.mrf.mxu0
    %v541 = vpop.f32.mrf.mxu0
    %542 = vdwg.mxu0
    %s543 = scalar_lea.vmem %s2, 32
    %v544 = vld [vmem:[%s543] sm:$0xf]
    %v545 = vld [vmem:[%s0] sm:$0xf]
    %v548 = vunpack.c.l.s4 1983009808
    %v549 = vunpack.c.0.s8 %v548
    %v550 = vlaneseq
    %v551 = vshrl.u32 %v550, 7
    %v552 = vsub.s32 %v549, %v551
    %v553 = vrot.slane %v545, %v552
    %v554 = vcombine.high %v553, %v553
    %555 = vrot.lane.b32.xlu0 %v553, 110
    %v556 = vpop.permute.xlu0 %555
    %557 = vrot.lane.b32.xlu0 %v554, 110
    %v558 = vpop.permute.xlu0 %557
    %vm559 = vcmask 900096
    %v560 = vsel %vm559, %v556, %v558
    %v562 = vsel %vm49, %v544, 0
    %v565 = vsel %vm53, %v560, 0
    %v568 = vsel %vm53, %v558, 0
    %570 = vmatprep.subr.bf16.mxu0 0
    %571 = vmatpush1.bf16.msra.mxu0 0
    %572 = vmatprep.subr.bf16.mxu0 0
    %573 = vmatpush1.bf16.msra.mxu0 0
    %574 = vmatprep.subr.bf16.mxu0 0
    %575 = vmatpush1.bf16.msra.mxu0 0
    %576 = vmatprep.subr.bf16.mxu0 0
    %577 = vmatpush1.bf16.msra.mxu0 0
    %578 = vmatprep.subr.bf16.mxu0 0
    %579 = vmatpush1.bf16.msra.mxu0 0
    %580 = vmatprep.subr.bf16.mxu0 0
    %581 = vmatpush1.bf16.msra.mxu0 0
    %582 = vmatprep.subr.bf16.mxu0 0
    %583 = vmatpush1.bf16.msra.mxu0 0
    %584 = vmatprep.subr.bf16.mxu0 %v568
    %585 = vmatpush1.bf16.msra.mxu0 %v565
    %586 = vmatprep.subr.bf16.mxu0 0
    %587 = vmatpush2.bf16.msra.mxu0 0
    %588 = vmatprep.subr.bf16.mxu0 0
    %589 = vmatpush2.bf16.msra.mxu0 0
    %590 = vmatprep.subr.bf16.mxu0 0
    %591 = vmatpush2.bf16.msra.mxu0 0
    %592 = vmatprep.subr.bf16.mxu0 0
    %593 = vmatpush2.bf16.msra.mxu0 0
    %594 = vmatprep.subr.bf16.mxu0 0
    %595 = vmatpush2.bf16.msra.mxu0 0
    %596 = vmatprep.subr.bf16.mxu0 0
    %597 = vmatpush2.bf16.msra.mxu0 0
    %598 = vmatprep.subr.bf16.mxu0 0
    %599 = vmatpush2.bf16.msra.mxu0 0
    %600 = vmatprep.subr.bf16.mxu0 0
    %601 = vmatpush2.bf16.msra.mxu0 0
    %602 = vmatprep.mubr.bf16.mxu0 0
    %603 = vmatmul.mubr.bf16.gmra.mxu0 %v562
    %v604 = vpop.f32.mrf.mxu0
    %v605 = vadd.f32 0.0, %v604
    %v606 = vpop.f32.mrf.mxu0
    %v607 = vadd.f32 0.0, %v606
    %v608 = vpop.f32.mrf.mxu0
    %v609 = vpop.f32.mrf.mxu0
    %610 = vdwg.mxu0
    %v611 = vadd.f32 %v537, %v605
    %v612 = vadd.f32 %v539, %v607
    %v614 = vlaneseq
    %v615 = vshrl.u32 %v614, 7
    %v616 = vsub.s32 0, %v615
    %v617 = vrot.slane %v25, %v616
    %v618 = vlaneseq
    %v619 = vshrl.u32 %v618, 7
    %v620 = vsub.s32 1, %v619
    %v621 = vrot.slane %v25, %v620
    %v624 = vmul.f32 %v617, %v219
    %v625 = vmul.f32 %v621, %v220
    %v626 = vadd.f32 %v415, %v624
    %v627 = vadd.f32 %v416, %v625
    %v629 = vlaneseq
    %v630 = vshrl.u32 %v629, 7
    %v631 = vsub.s32 0, %v630
    %v632 = vrot.slane %v27, %v631
    %v633 = vlaneseq
    %v634 = vshrl.u32 %v633, 7
    %v635 = vsub.s32 1, %v634
    %v636 = vrot.slane %v27, %v635
    %v639 = vmul.f32 %v632, %v611
    %v640 = vmul.f32 %v636, %v612
    %v641 = vadd.f32 %v626, %v639
    %v642 = vadd.f32 %v627, %v640
    %v643 = vld [vmem:[%s3] sm:$0xff]
    %645 = vset.pattern.permute.xlu0 0
    %646 = vperm.xlu0 %645, %v643
    %v647 = vpop.permute.xlu0 %646
    %v649 = vadd.f32 %v641, %v647
    %v650 = vadd.f32 %v642, %v647
    %v651 = vmax.f32 %v649, 0.0
    %v652 = vmax.f32 %v650, 0.0
    %v654 = vlaneseq
    %v655 = vshrl.u32 %v654, 7
    %v656 = vsub.s32 0, %v655
    %v657 = vrot.slane %v29, %v656
    %v658 = vlaneseq
    %v659 = vshrl.u32 %v658, 7
    %v660 = vsub.s32 1, %v659
    %v661 = vrot.slane %v29, %v660
    %v664 = vmul.f32 %v651, %v657
    %v665 = vmul.f32 %v652, %v661
    %vm666 = vcmask 68608
    %667 = vst.msk [vmem:[#allocation2] sm:$0xf] %vm666, 0
    %vm668 = vcmask 273608
    %669 = vst.msk [vmem:[#allocation2 + $0x4] sm:$0xf] %vm668, 0
    %v670 = vpack.c.bf16 %v664, %v664
    %v671 = vpack.c.bf16 %v665, %v665
    %v674 = vunpack.c.l.b16 %v670
    %v675 = vunpack.c.l.b16 %v671
    %v676 = vpack.c.b16 %v675, %v674
    %677 = vrot.lane.b32.xlu0 %v676, 9
    %v678 = vpop.permute.xlu0 %677
    %v679 = vrot.slane %v678, 4
    %vm680 = vcmask 72704
    %v681 = vsel %vm680, %v679, %v678
    %vm683 = vcmask 1043528
    %vm684 = vcmask 203780
    %vm685 = vmor %vm684, %vm683
    %686 = vst.msk [vmem:[#allocation2] sm:$0xff] %vm685, %v681
    %v687 = vld [vmem:[%s4] sm:$0xf]
    %v688 = vld [vmem:[#allocation2] sm:$0xff]
    %s689 = scalar_lea.vmem %s4, 12
    %v690 = vld [vmem:[%s689] sm:$0xf]
    %v692 = vunpack.c.l.b16 %v688
    %v693 = vunpack.c.h.b16 %v688
    %v694 = vpack.c.b16 %v692, %v692
    %v695 = vpack.c.b16 %v693, %v693
    %696 = vrot.lane.b32.xlu0 %v694, 120
    %v697 = vpop.permute.xlu0 %696
    %698 = vrot.lane.b32.xlu0 %v695, 120
    %v699 = vpop.permute.xlu0 %698
    %v700 = vsel %vm47, %v697, %v699
    %vm701 = vcmask 64512
    %v703 = vsel %vm701, %v690, 0
    %vm705 = vcmask 1043456
    %v707 = vsel %vm705, %v700, 0
    %v710 = vsel %vm705, %v699, 0
    %712 = vmatprep.subr.bf16.mxu0 0
    %713 = vmatpush1.bf16.msra.mxu0 0
    %714 = vmatprep.subr.bf16.mxu0 0
    %715 = vmatpush1.bf16.msra.mxu0 0
    %716 = vmatprep.subr.bf16.mxu0 0
    %717 = vmatpush1.bf16.msra.mxu0 0
    %718 = vmatprep.subr.bf16.mxu0 0
    %719 = vmatpush1.bf16.msra.mxu0 0
    %720 = vmatprep.subr.bf16.mxu0 0
    %721 = vmatpush1.bf16.msra.mxu0 0
    %722 = vmatprep.subr.bf16.mxu0 0
    %723 = vmatpush1.bf16.msra.mxu0 0
    %724 = vmatprep.subr.bf16.mxu0 0
    %725 = vmatpush1.bf16.msra.mxu0 0
    %726 = vmatprep.subr.bf16.mxu0 %v710
    %727 = vmatpush1.bf16.msra.mxu0 %v707
    %728 = vmatprep.subr.bf16.mxu0 0
    %729 = vmatpush2.bf16.msra.mxu0 0
    %730 = vmatprep.subr.bf16.mxu0 0
    %731 = vmatpush2.bf16.msra.mxu0 0
    %732 = vmatprep.subr.bf16.mxu0 0
    %733 = vmatpush2.bf16.msra.mxu0 0
    %734 = vmatprep.subr.bf16.mxu0 0
    %735 = vmatpush2.bf16.msra.mxu0 0
    %736 = vmatprep.subr.bf16.mxu0 0
    %737 = vmatpush2.bf16.msra.mxu0 0
    %738 = vmatprep.subr.bf16.mxu0 0
    %739 = vmatpush2.bf16.msra.mxu0 0
    %740 = vmatprep.subr.bf16.mxu0 0
    %741 = vmatpush2.bf16.msra.mxu0 0
    %742 = vmatprep.subr.bf16.mxu0 0
    %743 = vmatpush2.bf16.msra.mxu0 0
    %744 = vmatprep.mubr.bf16.mxu0 0
    %745 = vmatmul.mubr.bf16.gmra.mxu0 %v703
    %v746 = vpop.f32.mrf.mxu0
    %v747 = vadd.f32 0.0, %v746
    %v748 = vpop.f32.mrf.mxu0
    %v749 = vadd.f32 0.0, %v748
    %v750 = vpop.f32.mrf.mxu0
    %v751 = vpop.f32.mrf.mxu0
    %752 = vdwg.mxu0
    %v754 = vsel %vm701, %v687, 0
    %v757 = vsel %vm705, %v694, 0
    %v760 = vsel %vm705, %v695, 0
    %762 = vmatprep.subr.bf16.mxu0 0
    %763 = vmatpush1.bf16.msra.mxu0 0
    %764 = vmatprep.subr.bf16.mxu0 0
    %765 = vmatpush1.bf16.msra.mxu0 0
    %766 = vmatprep.subr.bf16.mxu0 0
    %767 = vmatpush1.bf16.msra.mxu0 0
    %768 = vmatprep.subr.bf16.mxu0 0
    %769 = vmatpush1.bf16.msra.mxu0 0
    %770 = vmatprep.subr.bf16.mxu0 0
    %771 = vmatpush1.bf16.msra.mxu0 0
    %772 = vmatprep.subr.bf16.mxu0 0
    %773 = vmatpush1.bf16.msra.mxu0 0
    %774 = vmatprep.subr.bf16.mxu0 0
    %775 = vmatpush1.bf16.msra.mxu0 0
    %776 = vmatprep.subr.bf16.mxu0 %v760
    %777 = vmatpush1.bf16.msra.mxu0 %v757
    %778 = vmatprep.subr.bf16.mxu0 0
    %779 = vmatpush2.bf16.msra.mxu0 0
    %780 = vmatprep.subr.bf16.mxu0 0
    %781 = vmatpush2.bf16.msra.mxu0 0
    %782 = vmatprep.subr.bf16.mxu0 0
    %783 = vmatpush2.bf16.msra.mxu0 0
    %784 = vmatprep.subr.bf16.mxu0 0
    %785 = vmatpush2.bf16.msra.mxu0 0
    %786 = vmatprep.subr.bf16.mxu0 0
    %787 = vmatpush2.bf16.msra.mxu0 0
    %788 = vmatprep.subr.bf16.mxu0 0
    %789 = vmatpush2.bf16.msra.mxu0 0
    %790 = vmatprep.subr.bf16.mxu0 0
    %791 = vmatpush2.bf16.msra.mxu0 0
    %792 = vmatprep.subr.bf16.mxu0 0
    %793 = vmatpush2.bf16.msra.mxu0 0
    %794 = vmatprep.mubr.bf16.mxu0 0
    %795 = vmatmul.mubr.bf16.gmra.mxu0 %v754
    %v796 = vpop.f32.mrf.mxu0
    %v797 = vadd.f32 %v747, %v796
    %v798 = vpop.f32.mrf.mxu0
    %v799 = vadd.f32 %v749, %v798
    %v800 = vpop.f32.mrf.mxu0
    %v801 = vpop.f32.mrf.mxu0
    %802 = vdwg.mxu0
    %s803 = scalar_lea.vmem %s4, 24
    %v804 = vld [vmem:[%s803] sm:$0xf]
    %805 = vrot.lane.b32.xlu0 %v694, 112
    %v806 = vpop.permute.xlu0 %805
    %807 = vrot.lane.b32.xlu0 %v695, 112
    %v808 = vpop.permute.xlu0 %807
    %v809 = vsel %vm167, %v806, %v808
    %v811 = vsel %vm701, %v804, 0
    %v814 = vsel %vm705, %v809, 0
    %v817 = vsel %vm705, %v808, 0
    %819 = vmatprep.subr.bf16.mxu0 0
    %820 = vmatpush1.bf16.msra.mxu0 0
    %821 = vmatprep.subr.bf16.mxu0 0
    %822 = vmatpush1.bf16.msra.mxu0 0
    %823 = vmatprep.subr.bf16.mxu0 0
    %824 = vmatpush1.bf16.msra.mxu0 0
    %825 = vmatprep.subr.bf16.mxu0 0
    %826 = vmatpush1.bf16.msra.mxu0 0
    %827 = vmatprep.subr.bf16.mxu0 0
    %828 = vmatpush1.bf16.msra.mxu0 0
    %829 = vmatprep.subr.bf16.mxu0 0
    %830 = vmatpush1.bf16.msra.mxu0 0
    %831 = vmatprep.subr.bf16.mxu0 0
    %832 = vmatpush1.bf16.msra.mxu0 0
    %833 = vmatprep.subr.bf16.mxu0 %v817
    %834 = vmatpush1.bf16.msra.mxu0 %v814
    %835 = vmatprep.subr.bf16.mxu0 0
    %836 = vmatpush2.bf16.msra.mxu0 0
    %837 = vmatprep.subr.bf16.mxu0 0
    %838 = vmatpush2.bf16.msra.mxu0 0
    %839 = vmatprep.subr.bf16.mxu0 0
    %840 = vmatpush2.bf16.msra.mxu0 0
    %841 = vmatprep.subr.bf16.mxu0 0
    %842 = vmatpush2.bf16.msra.mxu0 0
    %843 = vmatprep.subr.bf16.mxu0 0
    %844 = vmatpush2.bf16.msra.mxu0 0
    %845 = vmatprep.subr.bf16.mxu0 0
    %846 = vmatpush2.bf16.msra.mxu0 0
    %847 = vmatprep.subr.bf16.mxu0 0
    %848 = vmatpush2.bf16.msra.mxu0 0
    %849 = vmatprep.subr.bf16.mxu0 0
    %850 = vmatpush2.bf16.msra.mxu0 0
    %851 = vmatprep.mubr.bf16.mxu0 0
    %852 = vmatmul.mubr.bf16.gmra.mxu0 %v811
    %v853 = vpop.f32.mrf.mxu0
    %v854 = vadd.f32 0.0, %v853
    %v855 = vpop.f32.mrf.mxu0
    %v856 = vadd.f32 0.0, %v855
    %v857 = vpop.f32.mrf.mxu0
    %v858 = vpop.f32.mrf.mxu0
    %859 = vdwg.mxu0
    %v860 = vadd.f32 %v797, %v854
    %v861 = vadd.f32 %v799, %v856
    %s862 = scalar_lea.vmem %s4, 4
    %v863 = vld [vmem:[%s862] sm:$0xf]
    %s864 = scalar_lea.vmem %s4, 16
    %v865 = vld [vmem:[%s864] sm:$0xf]
    %866 = vrot.lane.b32.xlu0 %v694, 119
    %v867 = vpop.permute.xlu0 %866
    %868 = vrot.lane.b32.xlu0 %v695, 119
    %v869 = vpop.permute.xlu0 %868
    %v870 = vsel %vm239, %v867, %v869
    %v872 = vsel %vm701, %v865, 0
    %v875 = vsel %vm705, %v870, 0
    %v878 = vsel %vm705, %v869, 0
    %880 = vmatprep.subr.bf16.mxu0 0
    %881 = vmatpush1.bf16.msra.mxu0 0
    %882 = vmatprep.subr.bf16.mxu0 0
    %883 = vmatpush1.bf16.msra.mxu0 0
    %884 = vmatprep.subr.bf16.mxu0 0
    %885 = vmatpush1.bf16.msra.mxu0 0
    %886 = vmatprep.subr.bf16.mxu0 0
    %887 = vmatpush1.bf16.msra.mxu0 0
    %888 = vmatprep.subr.bf16.mxu0 0
    %889 = vmatpush1.bf16.msra.mxu0 0
    %890 = vmatprep.subr.bf16.mxu0 0
    %891 = vmatpush1.bf16.msra.mxu0 0
    %892 = vmatprep.subr.bf16.mxu0 0
    %893 = vmatpush1.bf16.msra.mxu0 0
    %894 = vmatprep.subr.bf16.mxu0 %v878
    %895 = vmatpush1.bf16.msra.mxu0 %v875
    %896 = vmatprep.subr.bf16.mxu0 0
    %897 = vmatpush2.bf16.msra.mxu0 0
    %898 = vmatprep.subr.bf16.mxu0 0
    %899 = vmatpush2.bf16.msra.mxu0 0
    %900 = vmatprep.subr.bf16.mxu0 0
    %901 = vmatpush2.bf16.msra.mxu0 0
    %902 = vmatprep.subr.bf16.mxu0 0
    %903 = vmatpush2.bf16.msra.mxu0 0
    %904 = vmatprep.subr.bf16.mxu0 0
    %905 = vmatpush2.bf16.msra.mxu0 0
    %906 = vmatprep.subr.bf16.mxu0 0
    %907 = vmatpush2.bf16.msra.mxu0 0
    %908 = vmatprep.subr.bf16.mxu0 0
    %909 = vmatpush2.bf16.msra.mxu0 0
    %910 = vmatprep.subr.bf16.mxu0 0
    %911 = vmatpush2.bf16.msra.mxu0 0
    %912 = vmatprep.mubr.bf16.mxu0 0
    %913 = vmatmul.mubr.bf16.gmra.mxu0 %v872
    %v914 = vpop.f32.mrf.mxu0
    %v915 = vadd.f32 0.0, %v914
    %v916 = vpop.f32.mrf.mxu0
    %v917 = vadd.f32 0.0, %v916
    %v918 = vpop.f32.mrf.mxu0
    %v919 = vpop.f32.mrf.mxu0
    %920 = vdwg.mxu0
    %921 = vrot.lane.b32.xlu0 %v694, 127
    %v922 = vpop.permute.xlu0 %921
    %923 = vrot.lane.b32.xlu0 %v695, 127
    %v924 = vpop.permute.xlu0 %923
    %v925 = vsel %vm295, %v922, %v924
    %v927 = vsel %vm701, %v863, 0
    %v930 = vsel %vm705, %v925, 0
    %v933 = vsel %vm705, %v924, 0
    %935 = vmatprep.subr.bf16.mxu0 0
    %936 = vmatpush1.bf16.msra.mxu0 0
    %937 = vmatprep.subr.bf16.mxu0 0
    %938 = vmatpush1.bf16.msra.mxu0 0
    %939 = vmatprep.subr.bf16.mxu0 0
    %940 = vmatpush1.bf16.msra.mxu0 0
    %941 = vmatprep.subr.bf16.mxu0 0
    %942 = vmatpush1.bf16.msra.mxu0 0
    %943 = vmatprep.subr.bf16.mxu0 0
    %944 = vmatpush1.bf16.msra.mxu0 0
    %945 = vmatprep.subr.bf16.mxu0 0
    %946 = vmatpush1.bf16.msra.mxu0 0
    %947 = vmatprep.subr.bf16.mxu0 0
    %948 = vmatpush1.bf16.msra.mxu0 0
    %949 = vmatprep.subr.bf16.mxu0 %v933
    %950 = vmatpush1.bf16.msra.mxu0 %v930
    %951 = vmatprep.subr.bf16.mxu0 0
    %952 = vmatpush2.bf16.msra.mxu0 0
    %953 = vmatprep.subr.bf16.mxu0 0
    %954 = vmatpush2.bf16.msra.mxu0 0
    %955 = vmatprep.subr.bf16.mxu0 0
    %956 = vmatpush2.bf16.msra.mxu0 0
    %957 = vmatprep.subr.bf16.mxu0 0
    %958 = vmatpush2.bf16.msra.mxu0 0
    %959 = vmatprep.subr.bf16.mxu0 0
    %960 = vmatpush2.bf16.msra.mxu0 0
    %961 = vmatprep.subr.bf16.mxu0 0
    %962 = vmatpush2.bf16.msra.mxu0 0
    %963 = vmatprep.subr.bf16.mxu0 0
    %964 = vmatpush2.bf16.msra.mxu0 0
    %965 = vmatprep.subr.bf16.mxu0 0
    %966 = vmatpush2.bf16.msra.mxu0 0
    %967 = vmatprep.mubr.bf16.mxu0 0
    %968 = vmatmul.mubr.bf16.gmra.mxu0 %v927
    %v969 = vpop.f32.mrf.mxu0
    %v970 = vadd.f32 %v915, %v969
    %v971 = vpop.f32.mrf.mxu0
    %v972 = vadd.f32 %v917, %v971
    %v973 = vpop.f32.mrf.mxu0
    %v974 = vpop.f32.mrf.mxu0
    %975 = vdwg.mxu0
    %s976 = scalar_lea.vmem %s4, 28
    %v977 = vld [vmem:[%s976] sm:$0xf]
    %978 = vrot.lane.b32.xlu0 %v694, 111
    %v979 = vpop.permute.xlu0 %978
    %980 = vrot.lane.b32.xlu0 %v695, 111
    %v981 = vpop.permute.xlu0 %980
    %v982 = vsel %vm363, %v979, %v981
    %v984 = vsel %vm701, %v977, 0
    %v987 = vsel %vm705, %v982, 0
    %v990 = vsel %vm705, %v981, 0
    %992 = vmatprep.subr.bf16.mxu0 0
    %993 = vmatpush1.bf16.msra.mxu0 0
    %994 = vmatprep.subr.bf16.mxu0 0
    %995 = vmatpush1.bf16.msra.mxu0 0
    %996 = vmatprep.subr.bf16.mxu0 0
    %997 = vmatpush1.bf16.msra.mxu0 0
    %998 = vmatprep.subr.bf16.mxu0 0
    %999 = vmatpush1.bf16.msra.mxu0 0
    %1000 = vmatprep.subr.bf16.mxu0 0
    %1001 = vmatpush1.bf16.msra.mxu0 0
    %1002 = vmatprep.subr.bf16.mxu0 0
    %1003 = vmatpush1.bf16.msra.mxu0 0
    %1004 = vmatprep.subr.bf16.mxu0 0
    %1005 = vmatpush1.bf16.msra.mxu0 0
    %1006 = vmatprep.subr.bf16.mxu0 %v990
    %1007 = vmatpush1.bf16.msra.mxu0 %v987
    %1008 = vmatprep.subr.bf16.mxu0 0
    %1009 = vmatpush2.bf16.msra.mxu0 0
    %1010 = vmatprep.subr.bf16.mxu0 0
    %1011 = vmatpush2.bf16.msra.mxu0 0
    %1012 = vmatprep.subr.bf16.mxu0 0
    %1013 = vmatpush2.bf16.msra.mxu0 0
    %1014 = vmatprep.subr.bf16.mxu0 0
    %1015 = vmatpush2.bf16.msra.mxu0 0
    %1016 = vmatprep.subr.bf16.mxu0 0
    %1017 = vmatpush2.bf16.msra.mxu0 0
    %1018 = vmatprep.subr.bf16.mxu0 0
    %1019 = vmatpush2.bf16.msra.mxu0 0
    %1020 = vmatprep.subr.bf16.mxu0 0
    %1021 = vmatpush2.bf16.msra.mxu0 0
    %1022 = vmatprep.subr.bf16.mxu0 0
    %1023 = vmatpush2.bf16.msra.mxu0 0
    %1024 = vmatprep.mubr.bf16.mxu0 0
    %1025 = vmatmul.mubr.bf16.gmra.mxu0 %v984
    %v1026 = vpop.f32.mrf.mxu0
    %v1027 = vadd.f32 0.0, %v1026
    %v1028 = vpop.f32.mrf.mxu0
    %v1029 = vadd.f32 0.0, %v1028
    %v1030 = vpop.f32.mrf.mxu0
    %v1031 = vpop.f32.mrf.mxu0
    %1032 = vdwg.mxu0
    %v1033 = vadd.f32 %v970, %v1027
    %v1034 = vadd.f32 %v972, %v1029
    %s1035 = scalar_lea.vmem %s4, 8
    %v1036 = vld [vmem:[%s1035] sm:$0xf]
    %s1037 = scalar_lea.vmem %s4, 20
    %v1038 = vld [vmem:[%s1037] sm:$0xf]
    %1039 = vrot.lane.b32.xlu0 %v694, 118
    %v1040 = vpop.permute.xlu0 %1039
    %1041 = vrot.lane.b32.xlu0 %v695, 118
    %v1042 = vpop.permute.xlu0 %1041
    %v1043 = vsel %vm435, %v1040, %v1042
    %v1045 = vsel %vm701, %v1038, 0
    %v1048 = vsel %vm705, %v1043, 0
    %v1051 = vsel %vm705, %v1042, 0
    %1053 = vmatprep.subr.bf16.mxu0 0
    %1054 = vmatpush1.bf16.msra.mxu0 0
    %1055 = vmatprep.subr.bf16.mxu0 0
    %1056 = vmatpush1.bf16.msra.mxu0 0
    %1057 = vmatprep.subr.bf16.mxu0 0
    %1058 = vmatpush1.bf16.msra.mxu0 0
    %1059 = vmatprep.subr.bf16.mxu0 0
    %1060 = vmatpush1.bf16.msra.mxu0 0
    %1061 = vmatprep.subr.bf16.mxu0 0
    %1062 = vmatpush1.bf16.msra.mxu0 0
    %1063 = vmatprep.subr.bf16.mxu0 0
    %1064 = vmatpush1.bf16.msra.mxu0 0
    %1065 = vmatprep.subr.bf16.mxu0 0
    %1066 = vmatpush1.bf16.msra.mxu0 0
    %1067 = vmatprep.subr.bf16.mxu0 %v1051
    %1068 = vmatpush1.bf16.msra.mxu0 %v1048
    %1069 = vmatprep.subr.bf16.mxu0 0
    %1070 = vmatpush2.bf16.msra.mxu0 0
    %1071 = vmatprep.subr.bf16.mxu0 0
    %1072 = vmatpush2.bf16.msra.mxu0 0
    %1073 = vmatprep.subr.bf16.mxu0 0
    %1074 = vmatpush2.bf16.msra.mxu0 0
    %1075 = vmatprep.subr.bf16.mxu0 0
    %1076 = vmatpush2.bf16.msra.mxu0 0
    %1077 = vmatprep.subr.bf16.mxu0 0
    %1078 = vmatpush2.bf16.msra.mxu0 0
    %1079 = vmatprep.subr.bf16.mxu0 0
    %1080 = vmatpush2.bf16.msra.mxu0 0
    %1081 = vmatprep.subr.bf16.mxu0 0
    %1082 = vmatpush2.bf16.msra.mxu0 0
    %1083 = vmatprep.subr.bf16.mxu0 0
    %1084 = vmatpush2.bf16.msra.mxu0 0
    %1085 = vmatprep.mubr.bf16.mxu0 0
    %1086 = vmatmul.mubr.bf16.gmra.mxu0 %v1045
    %v1087 = vpop.f32.mrf.mxu0
    %v1088 = vadd.f32 0.0, %v1087
    %v1089 = vpop.f32.mrf.mxu0
    %v1090 = vadd.f32 0.0, %v1089
    %v1091 = vpop.f32.mrf.mxu0
    %v1092 = vpop.f32.mrf.mxu0
    %1093 = vdwg.mxu0
    %1094 = vrot.lane.b32.xlu0 %v694, 126
    %v1095 = vpop.permute.xlu0 %1094
    %1096 = vrot.lane.b32.xlu0 %v695, 126
    %v1097 = vpop.permute.xlu0 %1096
    %v1098 = vsel %vm491, %v1095, %v1097
    %v1100 = vsel %vm701, %v1036, 0
    %v1103 = vsel %vm705, %v1098, 0
    %v1106 = vsel %vm705, %v1097, 0
    %1108 = vmatprep.subr.bf16.mxu0 0
    %1109 = vmatpush1.bf16.msra.mxu0 0
    %1110 = vmatprep.subr.bf16.mxu0 0
    %1111 = vmatpush1.bf16.msra.mxu0 0
    %1112 = vmatprep.subr.bf16.mxu0 0
    %1113 = vmatpush1.bf16.msra.mxu0 0
    %1114 = vmatprep.subr.bf16.mxu0 0
    %1115 = vmatpush1.bf16.msra.mxu0 0
    %1116 = vmatprep.subr.bf16.mxu0 0
    %1117 = vmatpush1.bf16.msra.mxu0 0
    %1118 = vmatprep.subr.bf16.mxu0 0
    %1119 = vmatpush1.bf16.msra.mxu0 0
    %1120 = vmatprep.subr.bf16.mxu0 0
    %1121 = vmatpush1.bf16.msra.mxu0 0
    %1122 = vmatprep.subr.bf16.mxu0 %v1106
    %1123 = vmatpush1.bf16.msra.mxu0 %v1103
    %1124 = vmatprep.subr.bf16.mxu0 0
    %1125 = vmatpush2.bf16.msra.mxu0 0
    %1126 = vmatprep.subr.bf16.mxu0 0
    %1127 = vmatpush2.bf16.msra.mxu0 0
    %1128 = vmatprep.subr.bf16.mxu0 0
    %1129 = vmatpush2.bf16.msra.mxu0 0
    %1130 = vmatprep.subr.bf16.mxu0 0
    %1131 = vmatpush2.bf16.msra.mxu0 0
    %1132 = vmatprep.subr.bf16.mxu0 0
    %1133 = vmatpush2.bf16.msra.mxu0 0
    %1134 = vmatprep.subr.bf16.mxu0 0
    %1135 = vmatpush2.bf16.msra.mxu0 0
    %1136 = vmatprep.subr.bf16.mxu0 0
    %1137 = vmatpush2.bf16.msra.mxu0 0
    %1138 = vmatprep.subr.bf16.mxu0 0
    %1139 = vmatpush2.bf16.msra.mxu0 0
    %1140 = vmatprep.mubr.bf16.mxu0 0
    %1141 = vmatmul.mubr.bf16.gmra.mxu0 %v1100
    %v1142 = vpop.f32.mrf.mxu0
    %v1143 = vadd.f32 %v1088, %v1142
    %v1144 = vpop.f32.mrf.mxu0
    %v1145 = vadd.f32 %v1090, %v1144
    %v1146 = vpop.f32.mrf.mxu0
    %v1147 = vpop.f32.mrf.mxu0
    %1148 = vdwg.mxu0
    %s1149 = scalar_lea.vmem %s4, 32
    %v1150 = vld [vmem:[%s1149] sm:$0xf]
    %1151 = vrot.lane.b32.xlu0 %v694, 110
    %v1152 = vpop.permute.xlu0 %1151
    %1153 = vrot.lane.b32.xlu0 %v695, 110
    %v1154 = vpop.permute.xlu0 %1153
    %v1155 = vsel %vm559, %v1152, %v1154
    %v1157 = vsel %vm701, %v1150, 0
    %v1160 = vsel %vm705, %v1155, 0
    %v1163 = vsel %vm705, %v1154, 0
    %1165 = vmatprep.subr.bf16.mxu0 0
    %1166 = vmatpush1.bf16.msra.mxu0 0
    %1167 = vmatprep.subr.bf16.mxu0 0
    %1168 = vmatpush1.bf16.msra.mxu0 0
    %1169 = vmatprep.subr.bf16.mxu0 0
    %1170 = vmatpush1.bf16.msra.mxu0 0
    %1171 = vmatprep.subr.bf16.mxu0 0
    %1172 = vmatpush1.bf16.msra.mxu0 0
    %1173 = vmatprep.subr.bf16.mxu0 0
    %1174 = vmatpush1.bf16.msra.mxu0 0
    %1175 = vmatprep.subr.bf16.mxu0 0
    %1176 = vmatpush1.bf16.msra.mxu0 0
    %1177 = vmatprep.subr.bf16.mxu0 0
    %1178 = vmatpush1.bf16.msra.mxu0 0
    %1179 = vmatprep.subr.bf16.mxu0 %v1163
    %1180 = vmatpush1.bf16.msra.mxu0 %v1160
    %1181 = vmatprep.subr.bf16.mxu0 0
    %1182 = vmatpush2.bf16.msra.mxu0 0
    %1183 = vmatprep.subr.bf16.mxu0 0
    %1184 = vmatpush2.bf16.msra.mxu0 0
    %1185 = vmatprep.subr.bf16.mxu0 0
    %1186 = vmatpush2.bf16.msra.mxu0 0
    %1187 = vmatprep.subr.bf16.mxu0 0
    %1188 = vmatpush2.bf16.msra.mxu0 0
    %1189 = vmatprep.subr.bf16.mxu0 0
    %1190 = vmatpush2.bf16.msra.mxu0 0
    %1191 = vmatprep.subr.bf16.mxu0 0
    %1192 = vmatpush2.bf16.msra.mxu0 0
    %1193 = vmatprep.subr.bf16.mxu0 0
    %1194 = vmatpush2.bf16.msra.mxu0 0
    %1195 = vmatprep.subr.bf16.mxu0 0
    %1196 = vmatpush2.bf16.msra.mxu0 0
    %1197 = vmatprep.mubr.bf16.mxu0 0
    %1198 = vmatmul.mubr.bf16.gmra.mxu0 %v1157
    %v1199 = vpop.f32.mrf.mxu0
    %v1200 = vadd.f32 0.0, %v1199
    %v1201 = vpop.f32.mrf.mxu0
    %v1202 = vadd.f32 0.0, %v1201
    %v1203 = vpop.f32.mrf.mxu0
    %v1204 = vpop.f32.mrf.mxu0
    %1205 = vdwg.mxu0
    %v1206 = vadd.f32 %v1143, %v1200
    %v1207 = vadd.f32 %v1145, %v1202
    %v1208 = vmul.f32 %v617, %v860
    %v1209 = vmul.f32 %v621, %v861
    %v1210 = vadd.f32 %v1033, %v1208
    %v1211 = vadd.f32 %v1034, %v1209
    %v1212 = vmul.f32 %v632, %v1206
    %v1213 = vmul.f32 %v636, %v1207
    %v1214 = vadd.f32 %v1210, %v1212
    %v1215 = vadd.f32 %v1211, %v1213
    %v1216 = vld [vmem:[%s5] sm:$0xff]
    %1218 = vset.pattern.permute.xlu0 0
    %1219 = vperm.xlu0 %1218, %v1216
    %v1220 = vpop.permute.xlu0 %1219
    %v1222 = vadd.f32 %v1214, %v1220
    %v1223 = vadd.f32 %v1215, %v1220
    %v1224 = vmax.f32 %v1222, 0.0
    %v1225 = vmax.f32 %v1223, 0.0
    %1228 = vrot.lane.b32.xlu0 %v1224, 120
    %v1229 = vpop.permute.xlu0 %1228
    %1230 = vrot.lane.b32.xlu0 %v1225, 120
    %v1231 = vpop.permute.xlu0 %1230
    %vm1232 = vcmask 982016
    %v1233 = vsel %vm1232, %v1229, %v1231
    %vm1235 = vcmask 523264
    %v1236 = vsel %vm1235, %v1224, %v1233
    %1237 = vst [vmem:[#allocation3] sm:$0xff] %v1236
    // Predicated region
    $region26: #{tpu_custom_call.1} parent=1 // pred_check
      _
    $region27: #{tpu_custom_call.1} parent=1 // pred_check_branch
      %1239 = sbr.rel (0) target = $region29
    $region28: #{tpu_custom_call.1} parent=1 // pred_region
      %s1241 = ssub.s32 128, 128
      %1242 = vsyncadd [#allocation4], %s1241
      %s1244 = sshll.u32 [#allocation3], 4
      %s1245 = int_to_ptr.vmem [resolvable:$true] %s1244
      %1247 = dma.vmem_to_hbm [thread:$0]  %s1245, 128, %s6, [#allocation4]
    $region29: #{tpu_custom_call.1} parent=1 // pred_fallthru
      _
    // Predicated region
    $region30: #{tpu_custom_call.1} parent=1 // pred_check
      _
    $region31: #{tpu_custom_call.1} parent=1 // pred_check_branch
      %1249 = sbr.rel (0) target = $region33
    $region32: #{tpu_custom_call.1} parent=1 // pred_region
      %1250 = dma.done [#allocation4], 128
    $region33: #{tpu_custom_call.1} parent=1 // pred_fallthru
      _
    %1251 = vsyncpa [#allocation4], 1

</llo_original>
